<compile_context>
chip_gen: v5e
topology: v5e:2x2
jax: 0.10.0
libtpu: 0.0.40
codegen_flags: <defaults>
</compile_context>

<pallas_src>
import functools

import numpy as np
import jax
import jax.numpy as jnp
from jax import lax
from jax.experimental import pallas as pl
from jax.experimental.pallas import tpu as pltpu

NEG_SLOPE = 0.2  # LeakyReLU slope used for the attention logits (GAT convention)


# ----------------------------------------------------------------------------- kernel

def _spat_att_kernel(x_ref, keep_ref, adj_f_ref, adj_b_ref, adj_g_ref,
                     w_ref, al_ref, ar_ref, out_ref, *, n_heads, hidden, p_drop):
    # x_ref / keep_ref: (1, N, F)    adj_*_ref: (1, N, N)
    # w_ref: (F, C) with C = (1 + 3*nH) * H   al_ref / ar_ref: (3*nH, H)
    # out_ref: (1, N, C)
    scale = jnp.float32(1.0 / (1.0 - p_drop))
    x = x_ref[0] * keep_ref[0] * scale                                   # fused dropout, (N, F)

    # One MXU matmul computes proj_fc and every head's Wa projection at once.
    z_all = jnp.dot(x, w_ref[...], preferred_element_type=jnp.float32)   # (N, C)

    outs = [z_all[:, :hidden]]                                           # proj_fc output (N, H)
    for br, adj_ref in enumerate((adj_f_ref, adj_b_ref, adj_g_ref)):
        adj = adj_ref[0]                                                 # (N, N)
        mask = adj > 0.0
        for h in range(n_heads):                                         # static unroll (tiny)
            idx = br * n_heads + h
            z = z_all[:, (1 + idx) * hidden:(2 + idx) * hidden]          # (N, H)
            al = al_ref[idx:idx + 1]                                     # (1, H)
            ar = ar_ref[idx:idx + 1]                                     # (1, H)

            # s_l as a (1, N) row and s_r as an (N, 1) column, both via MXU contractions
            # (no explicit sublane->lane transpose).
            s_l = lax.dot_general(al, z, (((1,), (1,)), ((), ())),
                                  preferred_element_type=jnp.float32)    # (1, N)
            s_r = lax.dot_general(z, ar, (((1,), (1,)), ((), ())),
                                  preferred_element_type=jnp.float32)    # (N, 1)

            # e[i, j] = leaky_relu(w_ij * s_l[j] + s_r[i])
            e = adj * s_l + s_r
            e = jnp.where(e > 0, e, NEG_SLOPE * e)

            # masked softmax over in-edges of each destination node
            e = jnp.where(mask, e, jnp.float32(-1e30))
            e_max = jnp.max(e, axis=-1, keepdims=True)
            e_max = jnp.where(e_max > jnp.float32(-1e29), e_max, 0.0)    # guard empty rows
            p = jnp.where(mask, jnp.exp(e - e_max), 0.0)
            denom = jnp.sum(p, axis=-1, keepdims=True)
            alpha = p / jnp.maximum(denom, 1e-9)

            # aggregate edge-pre-weighted source features (MXU)
            outs.append(jnp.dot(alpha * adj, z,
                                preferred_element_type=jnp.float32))     # (N, H)

    # single lane-dense store of the concatenated result
    out_ref[0] = jnp.concatenate(outs, axis=-1).astype(out_ref.dtype)    # (N, C)


# ----------------------------------------------------------------------------- wrapper

def spat_att_layer(feat, adj_fwd, adj_bwd, adj_geo, params, dropout_key, p_drop=0.1):
    """SpatAttLayer.forward: dropout -> proj_fc -> 3x MultiHeadPwGaAN -> concat (fused)."""
    B, N, F_ = feat.shape
    proj_w = params["proj_w"]                      # (F, H)
    H = proj_w.shape[1]
    nH = params["fwd"][0].shape[0]
    C = (1 + 3 * nH) * H

    def flat_wa(wa):                               # (nH, F, H) -> (F, nH*H), head-major columns
        return jnp.transpose(wa, (1, 0, 2)).reshape(F_, nH * H)

    w_all = jnp.concatenate(
        [proj_w] + [flat_wa(params[k][0]) for k in ("fwd", "bwd", "geo")], axis=1)   # (F, C)
    al_all = jnp.concatenate([params[k][1] for k in ("fwd", "bwd", "geo")],
                             axis=0).reshape(3 * nH, H)
    ar_all = jnp.concatenate([params[k][2] for k in ("fwd", "bwd", "geo")],
                             axis=0).reshape(3 * nH, H)

    # F.dropout(feat, 0.1): deterministic keep-mask built here, applied inside the kernel
    # (feat is only read from HBM once, by the single fused pallas_call).
    keep = jax.random.bernoulli(dropout_key, 1.0 - p_drop, feat.shape).astype(feat.dtype)

    kernel = functools.partial(_spat_att_kernel, n_heads=nH, hidden=H, p_drop=p_drop)

    # TODO(synk): for large N the (1, N, N) adjacency blocks must be row-tiled (grid over
    # destination-row tiles + online softmax) to stay inside VMEM, with ~half the tile
    # budget on v7x (64 MiB physical) vs v5e/v6e (128 MiB); unnecessary at these sizes.
    return pl.pallas_call(
        kernel,
        out_shape=jax.ShapeDtypeStruct((B, N, C), feat.dtype),
        grid=(B,),
        in_specs=[
            pl.BlockSpec((1, N, F_), lambda b: (b, 0, 0)),      # feat
            pl.BlockSpec((1, N, F_), lambda b: (b, 0, 0)),      # dropout keep-mask
            pl.BlockSpec((1, N, N), lambda b: (b, 0, 0)),       # adj fwd
            pl.BlockSpec((1, N, N), lambda b: (b, 0, 0)),       # adj bwd
            pl.BlockSpec((1, N, N), lambda b: (b, 0, 0)),       # adj geo
            pl.BlockSpec((F_, C), lambda b: (0, 0)),            # stacked weights
            pl.BlockSpec((3 * nH, H), lambda b: (0, 0)),        # a_l (all heads)
            pl.BlockSpec((3 * nH, H), lambda b: (0, 0)),        # a_r (all heads)
        ],
        out_specs=pl.BlockSpec((1, N, C), lambda b: (b, 0, 0)),
        compiler_params=pltpu.CompilerParams(dimension_semantics=("parallel",)),
    )(feat, keep, adj_fwd, adj_bwd, adj_geo, w_all, al_all, ar_all)


# ----------------------------------------------------------------------------- reference

def reference_spat_att(feat, adjs, params, dropout_key, p_drop=0.1):
    keep = jax.random.bernoulli(dropout_key, 1.0 - p_drop, feat.shape).astype(feat.dtype)
    x = (feat * keep * (1.0 / (1.0 - p_drop))).astype(feat.dtype)
    outs = [jnp.einsum("bnf,fh->bnh", x, params["proj_w"])]
    for name, adj in zip(("fwd", "bwd", "geo"), adjs):
        wa, al, ar = params[name]
        heads = []
        for h in range(wa.shape[0]):
            z = jnp.einsum("bnf,fh->bnh", x, wa[h])
            s_l = jnp.sum(z * al[h], axis=-1)                     # (B, N)
            s_r = jnp.sum(z * ar[h], axis=-1)                     # (B, N)
            e = adj * s_l[:, None, :] + s_r[:, :, None]
            e = jnp.where(e > 0, e, NEG_SLOPE * e)
            mask = adj > 0.0
            e = jnp.where(mask, e, -1e30)
            e = e - jnp.max(e, axis=-1, keepdims=True)
            p = jnp.where(mask, jnp.exp(e), 0.0)
            alpha = p / jnp.maximum(jnp.sum(p, axis=-1, keepdims=True), 1e-9)
            heads.append(jnp.einsum("bij,bjh->bih", alpha * adj, z))
        outs.append(jnp.concatenate(heads, axis=-1))
    return jnp.concatenate(outs, axis=-1)


# ----------------------------------------------------------------------------- main

if __name__ == "__main__":
    B, N, F, H, NH = 2, 16, 8, 32, 2   # batch graphs, nodes, feat_dim, hidden_dim, heads

    key = jax.random.PRNGKey(0)
    k_feat, k_drop, k_adj, k_par = jax.random.split(key, 4)

    feat = jax.random.normal(k_feat, (B, N, F), dtype=jnp.float32)

    def make_adj(k):
        kw, km = jax.random.split(k)
        w = jax.random.uniform(kw, (B, N, N), dtype=jnp.float32)
        m = jax.random.bernoulli(km, 0.5, (B, N, N))
        adj = jnp.where(m, w, 0.0)
        eye = jnp.eye(N, dtype=jnp.float32)[None]
        return jnp.maximum(adj, eye)      # self-loops: every node has >= 1 in-edge

    ka1, ka2, ka3 = jax.random.split(k_adj, 3)
    adj_fwd, adj_bwd, adj_geo = make_adj(ka1), make_adj(ka2), make_adj(ka3)

    # deterministic xavier_normal init, gain = calculate_gain('leaky_relu')
    gain = float(np.sqrt(2.0 / (1.0 + 0.01 ** 2)))

    def xavier(k, fan_in, fan_out, shape):
        std = gain * np.sqrt(2.0 / (fan_in + fan_out))
        return (std * jax.random.normal(k, shape, dtype=jnp.float32)).astype(jnp.float32)

    def make_branch(k):
        kwa, kal, kar = jax.random.split(k, 3)
        wa = jnp.stack([xavier(kk, F, H, (F, H)) for kk in jax.random.split(kwa, NH)])
        al = jnp.stack([xavier(kk, H, 1, (1, H)) for kk in jax.random.split(kal, NH)])
        ar = jnp.stack([xavier(kk, H, 1, (1, H)) for kk in jax.random.split(kar, NH)])
        return wa, al, ar

    kp, kf, kb, kg = jax.random.split(k_par, 4)
    params = {
        "proj_w": xavier(kp, F, H, (F, H)),
        "fwd": make_branch(kf),
        "bwd": make_branch(kb),
        "geo": make_branch(kg),
    }

    out = spat_att_layer(feat, adj_fwd, adj_bwd, adj_geo, params, k_drop)
    out = jax.block_until_ready(out)

    ref = reference_spat_att(feat, (adj_fwd, adj_bwd, adj_geo), params, k_drop)
    ref = jax.block_until_ready(ref)

    assert out.shape == (B, N, H * (1 + 3 * NH)), out.shape
    # tolerance accounts for MXU-vs-VPU contraction-order differences in the attention
    # logits (pure fp reordering, not an algorithmic difference)
    np.testing.assert_allclose(np.asarray(out), np.asarray(ref), rtol=5e-5, atol=5e-5)

    print("KERNEL_OK")
</pallas_src>

<mosaic_0001>
module attributes {stable_mosaic.version = 11 : i64} {
  func.func @_spat_att_kernel(%arg0: i32, %arg1: memref<1x16x8xf32, #tpu.memory_space<vmem>>, %arg2: memref<1x16x8xf32, #tpu.memory_space<vmem>>, %arg3: memref<1x16x16xf32, #tpu.memory_space<vmem>>, %arg4: memref<1x16x16xf32, #tpu.memory_space<vmem>>, %arg5: memref<1x16x16xf32, #tpu.memory_space<vmem>>, %arg6: memref<8x224xf32, #tpu.memory_space<vmem>>, %arg7: memref<6x32xf32, #tpu.memory_space<vmem>>, %arg8: memref<6x32xf32, #tpu.memory_space<vmem>>, %arg9: memref<1x16x224xf32, #tpu.memory_space<vmem>>) attributes {dimension_semantics = [#tpu.dimension_semantics<parallel>], iteration_bounds = array<i64: 2>, scalar_prefetch = 0 : i64, scratch_operands = 0 : i64, tpu.core_type = #tpu.core_type<tc>, window_params = [{transform_indices = @transform_0, window_bounds = array<i64: 1, 16, 8>}, {transform_indices = @transform_1, window_bounds = array<i64: 1, 16, 8>}, {transform_indices = @transform_2, window_bounds = array<i64: 1, 16, 16>}, {transform_indices = @transform_3, window_bounds = array<i64: 1, 16, 16>}, {transform_indices = @transform_4, window_bounds = array<i64: 1, 16, 16>}, {pipeline_mode = #tpu.pipeline_mode<synchronous>, transform_indices = @transform_5, window_bounds = array<i64: 8, 224>}, {pipeline_mode = #tpu.pipeline_mode<synchronous>, transform_indices = @transform_6, window_bounds = array<i64: 6, 32>}, {pipeline_mode = #tpu.pipeline_mode<synchronous>, transform_indices = @transform_7, window_bounds = array<i64: 6, 32>}, {transform_indices = @transform_8, window_bounds = array<i64: 1, 16, 224>}]} {
    %c0 = arith.constant 0 : index
    %c0_0 = arith.constant 0 : index
    %c0_1 = arith.constant 0 : index
    %0 = vector.load %arg1[%c0, %c0_0, %c0_1] : memref<1x16x8xf32, #tpu.memory_space<vmem>>, vector<1x16x8xf32>
    %1 = vector.shape_cast %0 : vector<1x16x8xf32> to vector<16x8xf32>
    %c0_2 = arith.constant 0 : index
    %c0_3 = arith.constant 0 : index
    %c0_4 = arith.constant 0 : index
    %2 = vector.load %arg2[%c0_2, %c0_3, %c0_4] : memref<1x16x8xf32, #tpu.memory_space<vmem>>, vector<1x16x8xf32>
    %3 = vector.shape_cast %2 : vector<1x16x8xf32> to vector<16x8xf32>
    %4 = arith.mulf %1, %3 : vector<16x8xf32>
    %cst = arith.constant 1.11111116 : f32
    %5 = vector.broadcast %cst : f32 to vector<16x8xf32>
    %6 = arith.mulf %4, %5 : vector<16x8xf32>
    %c0_5 = arith.constant 0 : index
    %c0_6 = arith.constant 0 : index
    %7 = vector.load %arg6[%c0_5, %c0_6] : memref<8x224xf32, #tpu.memory_space<vmem>>, vector<8x224xf32>
    %cst_7 = arith.constant dense<0.000000e+00> : vector<16x224xf32>
    %8 = tpu.matmul %6, %7, %cst_7 {dimension_numbers = #tpu.dot_dimension_numbers<[1], [0], [0], [1], [0, 0, 1, 1], [], []>} : vector<16x8xf32>, vector<8x224xf32>, vector<16x224xf32> -> vector<16x224xf32>
    %9 = vector.extract_strided_slice %8 {offsets = [0, 0], sizes = [16, 32], strides = [1, 1]} : vector<16x224xf32> to vector<16x32xf32>
    %c0_8 = arith.constant 0 : index
    %c0_9 = arith.constant 0 : index
    %c0_10 = arith.constant 0 : index
    %10 = vector.load %arg3[%c0_8, %c0_9, %c0_10] : memref<1x16x16xf32, #tpu.memory_space<vmem>>, vector<1x16x16xf32>
    %11 = vector.shape_cast %10 : vector<1x16x16xf32> to vector<16x16xf32>
    %cst_11 = arith.constant 0.000000e+00 : f32
    %12 = vector.broadcast %cst_11 : f32 to vector<16x16xf32>
    %13 = arith.cmpf ogt, %11, %12 : vector<16x16xf32>
    %14 = vector.extract_strided_slice %8 {offsets = [0, 32], sizes = [16, 32], strides = [1, 1]} : vector<16x224xf32> to vector<16x32xf32>
    %c0_12 = arith.constant 0 : index
    %c0_13 = arith.constant 0 : index
    %15 = vector.load %arg7[%c0_12, %c0_13] : memref<6x32xf32, #tpu.memory_space<vmem>>, vector<1x32xf32>
    %c0_14 = arith.constant 0 : index
    %c0_15 = arith.constant 0 : index
    %16 = vector.load %arg8[%c0_14, %c0_15] : memref<6x32xf32, #tpu.memory_space<vmem>>, vector<1x32xf32>
    %cst_16 = arith.constant dense<0.000000e+00> : vector<1x16xf32>
    %17 = tpu.matmul %15, %14, %cst_16 {dimension_numbers = #tpu.dot_dimension_numbers<[1], [1], [0], [0], [0, 0, 1, 0], [], []>} : vector<1x32xf32>, vector<16x32xf32>, vector<1x16xf32> -> vector<1x16xf32>
    %cst_17 = arith.constant dense<0.000000e+00> : vector<16x1xf32>
    %18 = tpu.matmul %14, %16, %cst_17 {dimension_numbers = #tpu.dot_dimension_numbers<[1], [1], [0], [0], [0, 0, 1, 0], [], []>} : vector<16x32xf32>, vector<1x32xf32>, vector<16x1xf32> -> vector<16x1xf32>
    %19 = vector.broadcast %17 : vector<1x16xf32> to vector<16x16xf32>
    %20 = arith.mulf %11, %19 : vector<16x16xf32>
    %21 = vector.broadcast %18 : vector<16x1xf32> to vector<16x16xf32>
    %22 = arith.addf %20, %21 : vector<16x16xf32>
    %cst_18 = arith.constant 0.000000e+00 : f32
    %23 = vector.broadcast %cst_18 : f32 to vector<16x16xf32>
    %24 = arith.cmpf ogt, %22, %23 : vector<16x16xf32>
    %cst_19 = arith.constant 2.000000e-01 : f32
    %25 = vector.broadcast %cst_19 : f32 to vector<16x16xf32>
    %26 = arith.mulf %25, %22 : vector<16x16xf32>
    %27 = arith.select %24, %22, %26 : vector<16x16xi1>, vector<16x16xf32>
    %cst_20 = arith.constant -1.000000e+30 : f32
    %28 = vector.broadcast %cst_20 : f32 to vector<16x16xf32>
    %29 = arith.select %13, %27, %28 : vector<16x16xi1>, vector<16x16xf32>
    %cst_21 = arith.constant dense<0xFF800000> : vector<16xf32>
    %30 = vector.multi_reduction <maximumf>, %29, %cst_21 [1] : vector<16x16xf32> to vector<16xf32>
    %31 = vector.shape_cast %30 : vector<16xf32> to vector<16x1xf32>
    %cst_22 = arith.constant -1.000000e+29 : f32
    %32 = vector.broadcast %cst_22 : f32 to vector<16x1xf32>
    %33 = arith.cmpf ogt, %31, %32 : vector<16x1xf32>
    %cst_23 = arith.constant 0.000000e+00 : f32
    %34 = vector.broadcast %cst_23 : f32 to vector<16x1xf32>
    %35 = arith.select %33, %31, %34 : vector<16x1xi1>, vector<16x1xf32>
    %36 = vector.broadcast %35 : vector<16x1xf32> to vector<16x16xf32>
    %37 = arith.subf %29, %36 : vector<16x16xf32>
    %38 = math.exp %37 : vector<16x16xf32>
    %cst_24 = arith.constant 0.000000e+00 : f32
    %39 = vector.broadcast %cst_24 : f32 to vector<16x16xf32>
    %40 = arith.select %13, %38, %39 : vector<16x16xi1>, vector<16x16xf32>
    %cst_25 = arith.constant dense<0.000000e+00> : vector<16xf32>
    %41 = vector.multi_reduction <add>, %40, %cst_25 [1] : vector<16x16xf32> to vector<16xf32>
    %42 = vector.shape_cast %41 : vector<16xf32> to vector<16x1xf32>
    %cst_26 = arith.constant 9.99999971E-10 : f32
    %43 = vector.broadcast %cst_26 : f32 to vector<16x1xf32>
    %44 = arith.maximumf %42, %43 : vector<16x1xf32>
    %45 = vector.broadcast %44 : vector<16x1xf32> to vector<16x16xf32>
    %46 = arith.divf %40, %45 : vector<16x16xf32>
    %47 = arith.mulf %46, %11 : vector<16x16xf32>
    %cst_27 = arith.constant dense<0.000000e+00> : vector<16x32xf32>
    %48 = tpu.matmul %47, %14, %cst_27 {dimension_numbers = #tpu.dot_dimension_numbers<[1], [0], [0], [1], [0, 0, 1, 1], [], []>} : vector<16x16xf32>, vector<16x32xf32>, vector<16x32xf32> -> vector<16x32xf32>
    %49 = vector.extract_strided_slice %8 {offsets = [0, 64], sizes = [16, 32], strides = [1, 1]} : vector<16x224xf32> to vector<16x32xf32>
    %c1 = arith.constant 1 : index
    %c0_28 = arith.constant 0 : index
    %50 = vector.load %arg7[%c1, %c0_28] : memref<6x32xf32, #tpu.memory_space<vmem>>, vector<1x32xf32>
    %c1_29 = arith.constant 1 : index
    %c0_30 = arith.constant 0 : index
    %51 = vector.load %arg8[%c1_29, %c0_30] : memref<6x32xf32, #tpu.memory_space<vmem>>, vector<1x32xf32>
    %cst_31 = arith.constant dense<0.000000e+00> : vector<1x16xf32>
    %52 = tpu.matmul %50, %49, %cst_31 {dimension_numbers = #tpu.dot_dimension_numbers<[1], [1], [0], [0], [0, 0, 1, 0], [], []>} : vector<1x32xf32>, vector<16x32xf32>, vector<1x16xf32> -> vector<1x16xf32>
    %cst_32 = arith.constant dense<0.000000e+00> : vector<16x1xf32>
    %53 = tpu.matmul %49, %51, %cst_32 {dimension_numbers = #tpu.dot_dimension_numbers<[1], [1], [0], [0], [0, 0, 1, 0], [], []>} : vector<16x32xf32>, vector<1x32xf32>, vector<16x1xf32> -> vector<16x1xf32>
    %54 = vector.broadcast %52 : vector<1x16xf32> to vector<16x16xf32>
    %55 = arith.mulf %11, %54 : vector<16x16xf32>
    %56 = vector.broadcast %53 : vector<16x1xf32> to vector<16x16xf32>
    %57 = arith.addf %55, %56 : vector<16x16xf32>
    %cst_33 = arith.constant 0.000000e+00 : f32
    %58 = vector.broadcast %cst_33 : f32 to vector<16x16xf32>
    %59 = arith.cmpf ogt, %57, %58 : vector<16x16xf32>
    %cst_34 = arith.constant 2.000000e-01 : f32
    %60 = vector.broadcast %cst_34 : f32 to vector<16x16xf32>
    %61 = arith.mulf %60, %57 : vector<16x16xf32>
    %62 = arith.select %59, %57, %61 : vector<16x16xi1>, vector<16x16xf32>
    %cst_35 = arith.constant -1.000000e+30 : f32
    %63 = vector.broadcast %cst_35 : f32 to vector<16x16xf32>
    %64 = arith.select %13, %62, %63 : vector<16x16xi1>, vector<16x16xf32>
    %cst_36 = arith.constant dense<0xFF800000> : vector<16xf32>
    %65 = vector.multi_reduction <maximumf>, %64, %cst_36 [1] : vector<16x16xf32> to vector<16xf32>
    %66 = vector.shape_cast %65 : vector<16xf32> to vector<16x1xf32>
    %cst_37 = arith.constant -1.000000e+29 : f32
    %67 = vector.broadcast %cst_37 : f32 to vector<16x1xf32>
    %68 = arith.cmpf ogt, %66, %67 : vector<16x1xf32>
    %cst_38 = arith.constant 0.000000e+00 : f32
    %69 = vector.broadcast %cst_38 : f32 to vector<16x1xf32>
    %70 = arith.select %68, %66, %69 : vector<16x1xi1>, vector<16x1xf32>
    %71 = vector.broadcast %70 : vector<16x1xf32> to vector<16x16xf32>
    %72 = arith.subf %64, %71 : vector<16x16xf32>
    %73 = math.exp %72 : vector<16x16xf32>
    %cst_39 = arith.constant 0.000000e+00 : f32
    %74 = vector.broadcast %cst_39 : f32 to vector<16x16xf32>
    %75 = arith.select %13, %73, %74 : vector<16x16xi1>, vector<16x16xf32>
    %cst_40 = arith.constant dense<0.000000e+00> : vector<16xf32>
    %76 = vector.multi_reduction <add>, %75, %cst_40 [1] : vector<16x16xf32> to vector<16xf32>
    %77 = vector.shape_cast %76 : vector<16xf32> to vector<16x1xf32>
    %cst_41 = arith.constant 9.99999971E-10 : f32
    %78 = vector.broadcast %cst_41 : f32 to vector<16x1xf32>
    %79 = arith.maximumf %77, %78 : vector<16x1xf32>
    %80 = vector.broadcast %79 : vector<16x1xf32> to vector<16x16xf32>
    %81 = arith.divf %75, %80 : vector<16x16xf32>
    %82 = arith.mulf %81, %11 : vector<16x16xf32>
    %cst_42 = arith.constant dense<0.000000e+00> : vector<16x32xf32>
    %83 = tpu.matmul %82, %49, %cst_42 {dimension_numbers = #tpu.dot_dimension_numbers<[1], [0], [0], [1], [0, 0, 1, 1], [], []>} : vector<16x16xf32>, vector<16x32xf32>, vector<16x32xf32> -> vector<16x32xf32>
    %c0_43 = arith.constant 0 : index
    %c0_44 = arith.constant 0 : index
    %c0_45 = arith.constant 0 : index
    %84 = vector.load %arg4[%c0_43, %c0_44, %c0_45] : memref<1x16x16xf32, #tpu.memory_space<vmem>>, vector<1x16x16xf32>
    %85 = vector.shape_cast %84 : vector<1x16x16xf32> to vector<16x16xf32>
    %cst_46 = arith.constant 0.000000e+00 : f32
    %86 = vector.broadcast %cst_46 : f32 to vector<16x16xf32>
    %87 = arith.cmpf ogt, %85, %86 : vector<16x16xf32>
    %88 = vector.extract_strided_slice %8 {offsets = [0, 96], sizes = [16, 32], strides = [1, 1]} : vector<16x224xf32> to vector<16x32xf32>
    %c2 = arith.constant 2 : index
    %c0_47 = arith.constant 0 : index
    %89 = vector.load %arg7[%c2, %c0_47] : memref<6x32xf32, #tpu.memory_space<vmem>>, vector<1x32xf32>
    %c2_48 = arith.constant 2 : index
    %c0_49 = arith.constant 0 : index
    %90 = vector.load %arg8[%c2_48, %c0_49] : memref<6x32xf32, #tpu.memory_space<vmem>>, vector<1x32xf32>
    %cst_50 = arith.constant dense<0.000000e+00> : vector<1x16xf32>
    %91 = tpu.matmul %89, %88, %cst_50 {dimension_numbers = #tpu.dot_dimension_numbers<[1], [1], [0], [0], [0, 0, 1, 0], [], []>} : vector<1x32xf32>, vector<16x32xf32>, vector<1x16xf32> -> vector<1x16xf32>
    %cst_51 = arith.constant dense<0.000000e+00> : vector<16x1xf32>
    %92 = tpu.matmul %88, %90, %cst_51 {dimension_numbers = #tpu.dot_dimension_numbers<[1], [1], [0], [0], [0, 0, 1, 0], [], []>} : vector<16x32xf32>, vector<1x32xf32>, vector<16x1xf32> -> vector<16x1xf32>
    %93 = vector.broadcast %91 : vector<1x16xf32> to vector<16x16xf32>
    %94 = arith.mulf %85, %93 : vector<16x16xf32>
    %95 = vector.broadcast %92 : vector<16x1xf32> to vector<16x16xf32>
    %96 = arith.addf %94, %95 : vector<16x16xf32>
    %cst_52 = arith.constant 0.000000e+00 : f32
    %97 = vector.broadcast %cst_52 : f32 to vector<16x16xf32>
    %98 = arith.cmpf ogt, %96, %97 : vector<16x16xf32>
    %cst_53 = arith.constant 2.000000e-01 : f32
    %99 = vector.broadcast %cst_53 : f32 to vector<16x16xf32>
    %100 = arith.mulf %99, %96 : vector<16x16xf32>
    %101 = arith.select %98, %96, %100 : vector<16x16xi1>, vector<16x16xf32>
    %cst_54 = arith.constant -1.000000e+30 : f32
    %102 = vector.broadcast %cst_54 : f32 to vector<16x16xf32>
    %103 = arith.select %87, %101, %102 : vector<16x16xi1>, vector<16x16xf32>
    %cst_55 = arith.constant dense<0xFF800000> : vector<16xf32>
    %104 = vector.multi_reduction <maximumf>, %103, %cst_55 [1] : vector<16x16xf32> to vector<16xf32>
    %105 = vector.shape_cast %104 : vector<16xf32> to vector<16x1xf32>
    %cst_56 = arith.constant -1.000000e+29 : f32
    %106 = vector.broadcast %cst_56 : f32 to vector<16x1xf32>
    %107 = arith.cmpf ogt, %105, %106 : vector<16x1xf32>
    %cst_57 = arith.constant 0.000000e+00 : f32
    %108 = vector.broadcast %cst_57 : f32 to vector<16x1xf32>
    %109 = arith.select %107, %105, %108 : vector<16x1xi1>, vector<16x1xf32>
    %110 = vector.broadcast %109 : vector<16x1xf32> to vector<16x16xf32>
    %111 = arith.subf %103, %110 : vector<16x16xf32>
    %112 = math.exp %111 : vector<16x16xf32>
    %cst_58 = arith.constant 0.000000e+00 : f32
    %113 = vector.broadcast %cst_58 : f32 to vector<16x16xf32>
    %114 = arith.select %87, %112, %113 : vector<16x16xi1>, vector<16x16xf32>
    %cst_59 = arith.constant dense<0.000000e+00> : vector<16xf32>
    %115 = vector.multi_reduction <add>, %114, %cst_59 [1] : vector<16x16xf32> to vector<16xf32>
    %116 = vector.shape_cast %115 : vector<16xf32> to vector<16x1xf32>
    %cst_60 = arith.constant 9.99999971E-10 : f32
    %117 = vector.broadcast %cst_60 : f32 to vector<16x1xf32>
    %118 = arith.maximumf %116, %117 : vector<16x1xf32>
    %119 = vector.broadcast %118 : vector<16x1xf32> to vector<16x16xf32>
    %120 = arith.divf %114, %119 : vector<16x16xf32>
    %121 = arith.mulf %120, %85 : vector<16x16xf32>
    %cst_61 = arith.constant dense<0.000000e+00> : vector<16x32xf32>
    %122 = tpu.matmul %121, %88, %cst_61 {dimension_numbers = #tpu.dot_dimension_numbers<[1], [0], [0], [1], [0, 0, 1, 1], [], []>} : vector<16x16xf32>, vector<16x32xf32>, vector<16x32xf32> -> vector<16x32xf32>
    %123 = vector.extract_strided_slice %8 {offsets = [0, 128], sizes = [16, 32], strides = [1, 1]} : vector<16x224xf32> to vector<16x32xf32>
    %c3 = arith.constant 3 : index
    %c0_62 = arith.constant 0 : index
    %124 = vector.load %arg7[%c3, %c0_62] : memref<6x32xf32, #tpu.memory_space<vmem>>, vector<1x32xf32>
    %c3_63 = arith.constant 3 : index
    %c0_64 = arith.constant 0 : index
    %125 = vector.load %arg8[%c3_63, %c0_64] : memref<6x32xf32, #tpu.memory_space<vmem>>, vector<1x32xf32>
    %cst_65 = arith.constant dense<0.000000e+00> : vector<1x16xf32>
    %126 = tpu.matmul %124, %123, %cst_65 {dimension_numbers = #tpu.dot_dimension_numbers<[1], [1], [0], [0], [0, 0, 1, 0], [], []>} : vector<1x32xf32>, vector<16x32xf32>, vector<1x16xf32> -> vector<1x16xf32>
    %cst_66 = arith.constant dense<0.000000e+00> : vector<16x1xf32>
    %127 = tpu.matmul %123, %125, %cst_66 {dimension_numbers = #tpu.dot_dimension_numbers<[1], [1], [0], [0], [0, 0, 1, 0], [], []>} : vector<16x32xf32>, vector<1x32xf32>, vector<16x1xf32> -> vector<16x1xf32>
    %128 = vector.broadcast %126 : vector<1x16xf32> to vector<16x16xf32>
    %129 = arith.mulf %85, %128 : vector<16x16xf32>
    %130 = vector.broadcast %127 : vector<16x1xf32> to vector<16x16xf32>
    %131 = arith.addf %129, %130 : vector<16x16xf32>
    %cst_67 = arith.constant 0.000000e+00 : f32
    %132 = vector.broadcast %cst_67 : f32 to vector<16x16xf32>
    %133 = arith.cmpf ogt, %131, %132 : vector<16x16xf32>
    %cst_68 = arith.constant 2.000000e-01 : f32
    %134 = vector.broadcast %cst_68 : f32 to vector<16x16xf32>
    %135 = arith.mulf %134, %131 : vector<16x16xf32>
    %136 = arith.select %133, %131, %135 : vector<16x16xi1>, vector<16x16xf32>
    %cst_69 = arith.constant -1.000000e+30 : f32
    %137 = vector.broadcast %cst_69 : f32 to vector<16x16xf32>
    %138 = arith.select %87, %136, %137 : vector<16x16xi1>, vector<16x16xf32>
    %cst_70 = arith.constant dense<0xFF800000> : vector<16xf32>
    %139 = vector.multi_reduction <maximumf>, %138, %cst_70 [1] : vector<16x16xf32> to vector<16xf32>
    %140 = vector.shape_cast %139 : vector<16xf32> to vector<16x1xf32>
    %cst_71 = arith.constant -1.000000e+29 : f32
    %141 = vector.broadcast %cst_71 : f32 to vector<16x1xf32>
    %142 = arith.cmpf ogt, %140, %141 : vector<16x1xf32>
    %cst_72 = arith.constant 0.000000e+00 : f32
    %143 = vector.broadcast %cst_72 : f32 to vector<16x1xf32>
    %144 = arith.select %142, %140, %143 : vector<16x1xi1>, vector<16x1xf32>
    %145 = vector.broadcast %144 : vector<16x1xf32> to vector<16x16xf32>
    %146 = arith.subf %138, %145 : vector<16x16xf32>
    %147 = math.exp %146 : vector<16x16xf32>
    %cst_73 = arith.constant 0.000000e+00 : f32
    %148 = vector.broadcast %cst_73 : f32 to vector<16x16xf32>
    %149 = arith.select %87, %147, %148 : vector<16x16xi1>, vector<16x16xf32>
    %cst_74 = arith.constant dense<0.000000e+00> : vector<16xf32>
    %150 = vector.multi_reduction <add>, %149, %cst_74 [1] : vector<16x16xf32> to vector<16xf32>
    %151 = vector.shape_cast %150 : vector<16xf32> to vector<16x1xf32>
    %cst_75 = arith.constant 9.99999971E-10 : f32
    %152 = vector.broadcast %cst_75 : f32 to vector<16x1xf32>
    %153 = arith.maximumf %151, %152 : vector<16x1xf32>
    %154 = vector.broadcast %153 : vector<16x1xf32> to vector<16x16xf32>
    %155 = arith.divf %149, %154 : vector<16x16xf32>
    %156 = arith.mulf %155, %85 : vector<16x16xf32>
    %cst_76 = arith.constant dense<0.000000e+00> : vector<16x32xf32>
    %157 = tpu.matmul %156, %123, %cst_76 {dimension_numbers = #tpu.dot_dimension_numbers<[1], [0], [0], [1], [0, 0, 1, 1], [], []>} : vector<16x16xf32>, vector<16x32xf32>, vector<16x32xf32> -> vector<16x32xf32>
    %c0_77 = arith.constant 0 : index
    %c0_78 = arith.constant 0 : index
    %c0_79 = arith.constant 0 : index
    %158 = vector.load %arg5[%c0_77, %c0_78, %c0_79] : memref<1x16x16xf32, #tpu.memory_space<vmem>>, vector<1x16x16xf32>
    %159 = vector.shape_cast %158 : vector<1x16x16xf32> to vector<16x16xf32>
    %cst_80 = arith.constant 0.000000e+00 : f32
    %160 = vector.broadcast %cst_80 : f32 to vector<16x16xf32>
    %161 = arith.cmpf ogt, %159, %160 : vector<16x16xf32>
    %162 = vector.extract_strided_slice %8 {offsets = [0, 160], sizes = [16, 32], strides = [1, 1]} : vector<16x224xf32> to vector<16x32xf32>
    %c4 = arith.constant 4 : index
    %c0_81 = arith.constant 0 : index
    %163 = vector.load %arg7[%c4, %c0_81] : memref<6x32xf32, #tpu.memory_space<vmem>>, vector<1x32xf32>
    %c4_82 = arith.constant 4 : index
    %c0_83 = arith.constant 0 : index
    %164 = vector.load %arg8[%c4_82, %c0_83] : memref<6x32xf32, #tpu.memory_space<vmem>>, vector<1x32xf32>
    %cst_84 = arith.constant dense<0.000000e+00> : vector<1x16xf32>
    %165 = tpu.matmul %163, %162, %cst_84 {dimension_numbers = #tpu.dot_dimension_numbers<[1], [1], [0], [0], [0, 0, 1, 0], [], []>} : vector<1x32xf32>, vector<16x32xf32>, vector<1x16xf32> -> vector<1x16xf32>
    %cst_85 = arith.constant dense<0.000000e+00> : vector<16x1xf32>
    %166 = tpu.matmul %162, %164, %cst_85 {dimension_numbers = #tpu.dot_dimension_numbers<[1], [1], [0], [0], [0, 0, 1, 0], [], []>} : vector<16x32xf32>, vector<1x32xf32>, vector<16x1xf32> -> vector<16x1xf32>
    %167 = vector.broadcast %165 : vector<1x16xf32> to vector<16x16xf32>
    %168 = arith.mulf %159, %167 : vector<16x16xf32>
    %169 = vector.broadcast %166 : vector<16x1xf32> to vector<16x16xf32>
    %170 = arith.addf %168, %169 : vector<16x16xf32>
    %cst_86 = arith.constant 0.000000e+00 : f32
    %171 = vector.broadcast %cst_86 : f32 to vector<16x16xf32>
    %172 = arith.cmpf ogt, %170, %171 : vector<16x16xf32>
    %cst_87 = arith.constant 2.000000e-01 : f32
    %173 = vector.broadcast %cst_87 : f32 to vector<16x16xf32>
    %174 = arith.mulf %173, %170 : vector<16x16xf32>
    %175 = arith.select %172, %170, %174 : vector<16x16xi1>, vector<16x16xf32>
    %cst_88 = arith.constant -1.000000e+30 : f32
    %176 = vector.broadcast %cst_88 : f32 to vector<16x16xf32>
    %177 = arith.select %161, %175, %176 : vector<16x16xi1>, vector<16x16xf32>
    %cst_89 = arith.constant dense<0xFF800000> : vector<16xf32>
    %178 = vector.multi_reduction <maximumf>, %177, %cst_89 [1] : vector<16x16xf32> to vector<16xf32>
    %179 = vector.shape_cast %178 : vector<16xf32> to vector<16x1xf32>
    %cst_90 = arith.constant -1.000000e+29 : f32
    %180 = vector.broadcast %cst_90 : f32 to vector<16x1xf32>
    %181 = arith.cmpf ogt, %179, %180 : vector<16x1xf32>
    %cst_91 = arith.constant 0.000000e+00 : f32
    %182 = vector.broadcast %cst_91 : f32 to vector<16x1xf32>
    %183 = arith.select %181, %179, %182 : vector<16x1xi1>, vector<16x1xf32>
    %184 = vector.broadcast %183 : vector<16x1xf32> to vector<16x16xf32>
    %185 = arith.subf %177, %184 : vector<16x16xf32>
    %186 = math.exp %185 : vector<16x16xf32>
    %cst_92 = arith.constant 0.000000e+00 : f32
    %187 = vector.broadcast %cst_92 : f32 to vector<16x16xf32>
    %188 = arith.select %161, %186, %187 : vector<16x16xi1>, vector<16x16xf32>
    %cst_93 = arith.constant dense<0.000000e+00> : vector<16xf32>
    %189 = vector.multi_reduction <add>, %188, %cst_93 [1] : vector<16x16xf32> to vector<16xf32>
    %190 = vector.shape_cast %189 : vector<16xf32> to vector<16x1xf32>
    %cst_94 = arith.constant 9.99999971E-10 : f32
    %191 = vector.broadcast %cst_94 : f32 to vector<16x1xf32>
    %192 = arith.maximumf %190, %191 : vector<16x1xf32>
    %193 = vector.broadcast %192 : vector<16x1xf32> to vector<16x16xf32>
    %194 = arith.divf %188, %193 : vector<16x16xf32>
    %195 = arith.mulf %194, %159 : vector<16x16xf32>
    %cst_95 = arith.constant dense<0.000000e+00> : vector<16x32xf32>
    %196 = tpu.matmul %195, %162, %cst_95 {dimension_numbers = #tpu.dot_dimension_numbers<[1], [0], [0], [1], [0, 0, 1, 1], [], []>} : vector<16x16xf32>, vector<16x32xf32>, vector<16x32xf32> -> vector<16x32xf32>
    %197 = vector.extract_strided_slice %8 {offsets = [0, 192], sizes = [16, 32], strides = [1, 1]} : vector<16x224xf32> to vector<16x32xf32>
    %c5 = arith.constant 5 : index
    %c0_96 = arith.constant 0 : index
    %198 = vector.load %arg7[%c5, %c0_96] : memref<6x32xf32, #tpu.memory_space<vmem>>, vector<1x32xf32>
    %c5_97 = arith.constant 5 : index
    %c0_98 = arith.constant 0 : index
    %199 = vector.load %arg8[%c5_97, %c0_98] : memref<6x32xf32, #tpu.memory_space<vmem>>, vector<1x32xf32>
    %cst_99 = arith.constant dense<0.000000e+00> : vector<1x16xf32>
    %200 = tpu.matmul %198, %197, %cst_99 {dimension_numbers = #tpu.dot_dimension_numbers<[1], [1], [0], [0], [0, 0, 1, 0], [], []>} : vector<1x32xf32>, vector<16x32xf32>, vector<1x16xf32> -> vector<1x16xf32>
    %cst_100 = arith.constant dense<0.000000e+00> : vector<16x1xf32>
    %201 = tpu.matmul %197, %199, %cst_100 {dimension_numbers = #tpu.dot_dimension_numbers<[1], [1], [0], [0], [0, 0, 1, 0], [], []>} : vector<16x32xf32>, vector<1x32xf32>, vector<16x1xf32> -> vector<16x1xf32>
    %202 = vector.broadcast %200 : vector<1x16xf32> to vector<16x16xf32>
    %203 = arith.mulf %159, %202 : vector<16x16xf32>
    %204 = vector.broadcast %201 : vector<16x1xf32> to vector<16x16xf32>
    %205 = arith.addf %203, %204 : vector<16x16xf32>
    %cst_101 = arith.constant 0.000000e+00 : f32
    %206 = vector.broadcast %cst_101 : f32 to vector<16x16xf32>
    %207 = arith.cmpf ogt, %205, %206 : vector<16x16xf32>
    %cst_102 = arith.constant 2.000000e-01 : f32
    %208 = vector.broadcast %cst_102 : f32 to vector<16x16xf32>
    %209 = arith.mulf %208, %205 : vector<16x16xf32>
    %210 = arith.select %207, %205, %209 : vector<16x16xi1>, vector<16x16xf32>
    %cst_103 = arith.constant -1.000000e+30 : f32
    %211 = vector.broadcast %cst_103 : f32 to vector<16x16xf32>
    %212 = arith.select %161, %210, %211 : vector<16x16xi1>, vector<16x16xf32>
    %cst_104 = arith.constant dense<0xFF800000> : vector<16xf32>
    %213 = vector.multi_reduction <maximumf>, %212, %cst_104 [1] : vector<16x16xf32> to vector<16xf32>
    %214 = vector.shape_cast %213 : vector<16xf32> to vector<16x1xf32>
    %cst_105 = arith.constant -1.000000e+29 : f32
    %215 = vector.broadcast %cst_105 : f32 to vector<16x1xf32>
    %216 = arith.cmpf ogt, %214, %215 : vector<16x1xf32>
    %cst_106 = arith.constant 0.000000e+00 : f32
    %217 = vector.broadcast %cst_106 : f32 to vector<16x1xf32>
    %218 = arith.select %216, %214, %217 : vector<16x1xi1>, vector<16x1xf32>
    %219 = vector.broadcast %218 : vector<16x1xf32> to vector<16x16xf32>
    %220 = arith.subf %212, %219 : vector<16x16xf32>
    %221 = math.exp %220 : vector<16x16xf32>
    %cst_107 = arith.constant 0.000000e+00 : f32
    %222 = vector.broadcast %cst_107 : f32 to vector<16x16xf32>
    %223 = arith.select %161, %221, %222 : vector<16x16xi1>, vector<16x16xf32>
    %cst_108 = arith.constant dense<0.000000e+00> : vector<16xf32>
    %224 = vector.multi_reduction <add>, %223, %cst_108 [1] : vector<16x16xf32> to vector<16xf32>
    %225 = vector.shape_cast %224 : vector<16xf32> to vector<16x1xf32>
    %cst_109 = arith.constant 9.99999971E-10 : f32
    %226 = vector.broadcast %cst_109 : f32 to vector<16x1xf32>
    %227 = arith.maximumf %225, %226 : vector<16x1xf32>
    %228 = vector.broadcast %227 : vector<16x1xf32> to vector<16x16xf32>
    %229 = arith.divf %223, %228 : vector<16x16xf32>
    %230 = arith.mulf %229, %159 : vector<16x16xf32>
    %cst_110 = arith.constant dense<0.000000e+00> : vector<16x32xf32>
    %231 = tpu.matmul %230, %197, %cst_110 {dimension_numbers = #tpu.dot_dimension_numbers<[1], [0], [0], [1], [0, 0, 1, 1], [], []>} : vector<16x16xf32>, vector<16x32xf32>, vector<16x32xf32> -> vector<16x32xf32>
    %232 = tpu.concatenate %9, %48, %83, %122, %157, %196, %231 in 1 : vector<16x32xf32>, vector<16x32xf32>, vector<16x32xf32>, vector<16x32xf32>, vector<16x32xf32>, vector<16x32xf32>, vector<16x32xf32> -> vector<16x224xf32>
    %c0_111 = arith.constant 0 : index
    %c0_112 = arith.constant 0 : index
    %c0_113 = arith.constant 0 : index
    %233 = vector.load %arg9[%c0_111, %c0_112, %c0_113] : memref<1x16x224xf32, #tpu.memory_space<vmem>>, vector<1x16x224xf32>
    %234 = vector.shape_cast %233 : vector<1x16x224xf32> to vector<16x224xf32>
    %235 = vector.shape_cast %232 : vector<16x224xf32> to vector<1x16x224xf32>
    tpu.vector_store %arg9[%c0_111, %c0_112, %c0_113], %235 {strides = array<i32>} : memref<1x16x224xf32, #tpu.memory_space<vmem>>, vector<1x16x224xf32>,
    return
  }
  func.func @transform_0(%arg0: i32) -> (i32, i32, i32) {
    %c0_i32 = arith.constant 0 : i32
    %c0_i32_0 = arith.constant 0 : i32
    %c0_i32_1 = arith.constant 0 : i32
    return %arg0, %c0_i32, %c0_i32_0 : i32, i32, i32
  }
  func.func @transform_1(%arg0: i32) -> (i32, i32, i32) {
    %c0_i32 = arith.constant 0 : i32
    %c0_i32_0 = arith.constant 0 : i32
    %c0_i32_1 = arith.constant 0 : i32
    return %arg0, %c0_i32, %c0_i32_0 : i32, i32, i32
  }
  func.func @transform_2(%arg0: i32) -> (i32, i32, i32) {
    %c0_i32 = arith.constant 0 : i32
    %c0_i32_0 = arith.constant 0 : i32
    %c0_i32_1 = arith.constant 0 : i32
    return %arg0, %c0_i32, %c0_i32_0 : i32, i32, i32
  }
  func.func @transform_3(%arg0: i32) -> (i32, i32, i32) {
    %c0_i32 = arith.constant 0 : i32
    %c0_i32_0 = arith.constant 0 : i32
    %c0_i32_1 = arith.constant 0 : i32
    return %arg0, %c0_i32, %c0_i32_0 : i32, i32, i32
  }
  func.func @transform_4(%arg0: i32) -> (i32, i32, i32) {
    %c0_i32 = arith.constant 0 : i32
    %c0_i32_0 = arith.constant 0 : i32
    %c0_i32_1 = arith.constant 0 : i32
    return %arg0, %c0_i32, %c0_i32_0 : i32, i32, i32
  }
  func.func @transform_5(%arg0: i32) -> (i32, i32) {
    %c0_i32 = arith.constant 0 : i32
    %c0_i32_0 = arith.constant 0 : i32
    %c0_i32_1 = arith.constant 0 : i32
    return %c0_i32, %c0_i32_0 : i32, i32
  }
  func.func @transform_6(%arg0: i32) -> (i32, i32) {
    %c0_i32 = arith.constant 0 : i32
    %c0_i32_0 = arith.constant 0 : i32
    %c0_i32_1 = arith.constant 0 : i32
    return %c0_i32, %c0_i32_0 : i32, i32
  }
  func.func @transform_7(%arg0: i32) -> (i32, i32) {
    %c0_i32 = arith.constant 0 : i32
    %c0_i32_0 = arith.constant 0 : i32
    %c0_i32_1 = arith.constant 0 : i32
    return %c0_i32, %c0_i32_0 : i32, i32
  }
  func.func @transform_8(%arg0: i32) -> (i32, i32, i32) {
    %c0_i32 = arith.constant 0 : i32
    %c0_i32_0 = arith.constant 0 : i32
    %c0_i32_1 = arith.constant 0 : i32
    return %arg0, %c0_i32, %c0_i32_0 : i32, i32, i32
  }
}

</mosaic_0001>

<llo_original>
// kernel: tpu_custom_call.1
$region0: #{tpu_custom_call.1}
  #allocation0 [shape = 'u32[]', space=smem, size = 0x4, offset = 0x4, fixed_abs, tag = 'smem constant byte address 0x4 - core index']
  #allocation1 [shape = 'u32[72,128]{1,0:T(1,128)}', space=vmem, size = 0x9000, scoped, tag = 'internal scratch']
  %s0 = inlined_call_operand.vmem [shape: f32[2,16,8], index: 0, kind: input, shape index: {}]
  %s1 = inlined_call_operand.vmem [shape: f32[2,16,8], index: 1, kind: input, shape index: {}]
  %s2 = inlined_call_operand.vmem [shape: f32[2,16,16], index: 2, kind: input, shape index: {}]
  %s3 = inlined_call_operand.vmem [shape: f32[2,16,16], index: 3, kind: input, shape index: {}]
  %s4 = inlined_call_operand.hbm [shape: f32[2,16,16], index: 4, kind: input, shape index: {}]
  %s5 = inlined_call_operand.vmem [shape: f32[8,224], index: 5, kind: input, shape index: {}]
  %s6 = inlined_call_operand.hbm [shape: f32[6,32], index: 6, kind: input, shape index: {}]
  %s7 = inlined_call_operand.hbm [shape: f32[6,32], index: 7, kind: input, shape index: {}]
  %s8 = inlined_call_operand.hbm [shape: f32[2,16,224], index: 8, kind: output, shape index: {}]
  %s9 = sld [smem:[#allocation0]]
  $region77: #{tpu_custom_call.1} parent=0
    _
  %s11 = ssub.s32 1, %s9
  %s12 = scalar_select 0, %s11, %s9
  $region1: #{tpu_custom_call.1} parent=0
    #allocation2 [shape = 'u8[16384]{0}', space=vmem, size = 0x4000, scoped, tag = 'input window, operand 4']
    #allocation3 [shape = 's32[2]{0}', space=sflag, size = 0x8, scoped, tag = 'scoped memory for tpu_custom_call.1']
    #allocation4 [shape = 's32[2]{0}', space=sflag, size = 0x8, scoped, tag = 'scoped memory for tpu_custom_call.1']
    #allocation5 [shape = 'u8[4096]{0}', space=vmem, size = 0x1000, scoped, tag = 'input window, operand 6, single buffered']
    #allocation6 [shape = 's32[1]{0}', space=sflag, size = 0x4, scoped, tag = 'scoped memory for tpu_custom_call.1']
    #allocation7 [shape = 'u8[4096]{0}', space=vmem, size = 0x1000, scoped, tag = 'input window, operand 7, single buffered']
    #allocation8 [shape = 'u8[32768]{0}', space=vmem, size = 0x8000, scoped, tag = 'output window, operand 0']
    %13 = vsyncpa [#allocation3], 0
    %s14 = scalar_lea.sflag [#allocation3], 1
    %15 = vsyncpa %s14, 0
    %16 = vsyncpa [#allocation6], 0
    %17 = vsyncpa [#allocation4], 0
    %s18 = scalar_lea.sflag [#allocation4], 1
    %19 = vsyncpa %s18, 0
    loop: start=0, step=1, limit=4
    $region2: #{tpu_custom_call.1} parent=1 // loop_pre_header
      _
    $region3: #{tpu_custom_call.1} parent=1 // loop_header
      %s21 = sphi 0, %s25
      %p22 = scmp.ge.s32.totalorder %s21, 4
      %s31 = sphi 0, %s33
      %s34 = sphi 0, %s31
      %s35 = sphi 0, %s34
      %s51 = sphi 0, %s35
      %s57 = sphi 0, %s59
      %s60 = sphi 0, %s57
      %s61 = sphi 0, %s60
      %s77 = sphi 0, %s61
      %s83 = sphi 0, %s85
      %s86 = sphi 0, %s83
      %s87 = sphi 0, %s86
      %s103 = sphi 0, %s87
      %s109 = sphi 0, %s111
      %s112 = sphi 0, %s109
      %s113 = sphi 0, %s112
      %s129 = sphi 0, %s113
      %s135 = sphi 0, %s137
      %s138 = sphi 0, %s135
      %s139 = sphi 0, %s138
      %s155 = sphi 0, %s139
      %s159 = sphi 0, %s159
      %s161 = sphi 0, %s159
      %s162 = sphi 0, %s161
      %s176 = sphi 0, %s162
      %s180 = sphi 0, %s180
      %s182 = sphi 0, %s180
      %s183 = sphi 0, %s182
      %s197 = sphi 0, %s183
      %s201 = sphi 0, %s201
      %s203 = sphi 0, %s201
      %s204 = sphi 0, %s203
      %s218 = sphi 0, %s204
      %s224 = sphi 0, %s226
      %s227 = sphi 0, %s224
      %s228 = sphi 0, %s227
      %s244 = sphi 0, %s228
    $region4: #{tpu_custom_call.1} parent=1 // loop_header_branch
      %24 = sbr.rel (%p22) target = $region8
    $region5: #{tpu_custom_call.1} parent=1 // loop_body
      %s26 = ssub.s32 %s21, 1
      %s27 = ssub.s32 %s21, 2
      %s28 = sadd.s32 %s21, 1
      %s29 = ssub.s32 %s21, %s28
      %p30 = scmp.eq.s32.totalorder %s29, 0
      %s32 = sadd.s32 %s31, 1
      %s33 = scalar_select %p30, %s31, %s32
      %p36 = pneg %p30
      %p37 = scmp.eq.s32.totalorder %s21, 1
      %p38 = por %p36, %p37
      %p39 = scmp.ne.s32.totalorder %s31, %s34
      %p40 = scmp.eq.s32.totalorder %s21, 0
      %p41 = por %p39, %p40
      %p42 = scmp.ne.s32.totalorder %s31, %s34
      %p43 = scmp.eq.s32.totalorder %s26, 1
      %p44 = por %p42, %p43
      %p45 = scmp.ne.s32.totalorder %s34, %s35
      %p46 = scmp.eq.s32.totalorder %s26, 0
      %p47 = por %p45, %p46
      %p48 = scmp.ne.s32.totalorder %s34, %s35
      %p49 = scmp.eq.s32.totalorder %s27, 1
      %p50 = por %p48, %p49
      %p52 = scmp.ne.s32.totalorder %s35, %s51
      %p53 = scmp.eq.s32.totalorder %s27, 0
      %p54 = por %p52, %p53
      %s55 = ssub.s32 %s21, %s28
      %p56 = scmp.eq.s32.totalorder %s55, 0
      %s58 = sadd.s32 %s57, 1
      %s59 = scalar_select %p56, %s57, %s58
      %p62 = pneg %p56
      %p63 = scmp.eq.s32.totalorder %s21, 1
      %p64 = por %p62, %p63
      %p65 = scmp.ne.s32.totalorder %s57, %s60
      %p66 = scmp.eq.s32.totalorder %s21, 0
      %p67 = por %p65, %p66
      %p68 = scmp.ne.s32.totalorder %s57, %s60
      %p69 = scmp.eq.s32.totalorder %s26, 1
      %p70 = por %p68, %p69
      %p71 = scmp.ne.s32.totalorder %s60, %s61
      %p72 = scmp.eq.s32.totalorder %s26, 0
      %p73 = por %p71, %p72
      %p74 = scmp.ne.s32.totalorder %s60, %s61
      %p75 = scmp.eq.s32.totalorder %s27, 1
      %p76 = por %p74, %p75
      %p78 = scmp.ne.s32.totalorder %s61, %s77
      %p79 = scmp.eq.s32.totalorder %s27, 0
      %p80 = por %p78, %p79
      %s81 = ssub.s32 %s21, %s28
      %p82 = scmp.eq.s32.totalorder %s81, 0
      %s84 = sadd.s32 %s83, 1
      %s85 = scalar_select %p82, %s83, %s84
      %p88 = pneg %p82
      %p89 = scmp.eq.s32.totalorder %s21, 1
      %p90 = por %p88, %p89
      %p91 = scmp.ne.s32.totalorder %s83, %s86
      %p92 = scmp.eq.s32.totalorder %s21, 0
      %p93 = por %p91, %p92
      %p94 = scmp.ne.s32.totalorder %s83, %s86
      %p95 = scmp.eq.s32.totalorder %s26, 1
      %p96 = por %p94, %p95
      %p97 = scmp.ne.s32.totalorder %s86, %s87
      %p98 = scmp.eq.s32.totalorder %s26, 0
      %p99 = por %p97, %p98
      %p100 = scmp.ne.s32.totalorder %s86, %s87
      %p101 = scmp.eq.s32.totalorder %s27, 1
      %p102 = por %p100, %p101
      %p104 = scmp.ne.s32.totalorder %s87, %s103
      %p105 = scmp.eq.s32.totalorder %s27, 0
      %p106 = por %p104, %p105
      %s107 = ssub.s32 %s21, %s28
      %p108 = scmp.eq.s32.totalorder %s107, 0
      %s110 = sadd.s32 %s109, 1
      %s111 = scalar_select %p108, %s109, %s110
      %p114 = pneg %p108
      %p115 = scmp.eq.s32.totalorder %s21, 1
      %p116 = por %p114, %p115
      %p117 = scmp.ne.s32.totalorder %s109, %s112
      %p118 = scmp.eq.s32.totalorder %s21, 0
      %p119 = por %p117, %p118
      %p120 = scmp.ne.s32.totalorder %s109, %s112
      %p121 = scmp.eq.s32.totalorder %s26, 1
      %p122 = por %p120, %p121
      %p123 = scmp.ne.s32.totalorder %s112, %s113
      %p124 = scmp.eq.s32.totalorder %s26, 0
      %p125 = por %p123, %p124
      %p126 = scmp.ne.s32.totalorder %s112, %s113
      %p127 = scmp.eq.s32.totalorder %s27, 1
      %p128 = por %p126, %p127
      %p130 = scmp.ne.s32.totalorder %s113, %s129
      %p131 = scmp.eq.s32.totalorder %s27, 0
      %p132 = por %p130, %p131
      %s133 = ssub.s32 %s21, %s28
      %p134 = scmp.eq.s32.totalorder %s133, 0
      %s136 = sadd.s32 %s135, 1
      %s137 = scalar_select %p134, %s135, %s136
      %p140 = pneg %p134
      %p141 = scmp.eq.s32.totalorder %s21, 1
      %p142 = por %p140, %p141
      %p143 = scmp.ne.s32.totalorder %s135, %s138
      %p144 = scmp.eq.s32.totalorder %s21, 0
      %p145 = por %p143, %p144
      %p146 = scmp.ne.s32.totalorder %s135, %s138
      %p147 = scmp.eq.s32.totalorder %s26, 1
      %p148 = por %p146, %p147
      %p149 = scmp.ne.s32.totalorder %s138, %s139
      %p150 = scmp.eq.s32.totalorder %s26, 0
      %p151 = por %p149, %p150
      %p152 = scmp.ne.s32.totalorder %s138, %s139
      %p153 = scmp.eq.s32.totalorder %s27, 1
      %p154 = por %p152, %p153
      %p156 = scmp.ne.s32.totalorder %s139, %s155
      %p157 = scmp.eq.s32.totalorder %s27, 0
      %p158 = por %p156, %p157
      %s160 = sadd.s32 %s159, 1
      %p163 = scmp.eq.s32.totalorder %s21, 1
      %p164 = scmp.ne.s32.totalorder %s159, %s161
      %p165 = scmp.eq.s32.totalorder %s21, 0
      %p166 = por %p164, %p165
      %p167 = scmp.ne.s32.totalorder %s159, %s161
      %p168 = scmp.eq.s32.totalorder %s26, 1
      %p169 = por %p167, %p168
      %p170 = scmp.ne.s32.totalorder %s161, %s162
      %p171 = scmp.eq.s32.totalorder %s26, 0
      %p172 = por %p170, %p171
      %p173 = scmp.ne.s32.totalorder %s161, %s162
      %p174 = scmp.eq.s32.totalorder %s27, 1
      %p175 = por %p173, %p174
      %p177 = scmp.ne.s32.totalorder %s162, %s176
      %p178 = scmp.eq.s32.totalorder %s27, 0
      %p179 = por %p177, %p178
      %s181 = sadd.s32 %s180, 1
      %p184 = scmp.eq.s32.totalorder %s21, 1
      %p185 = scmp.ne.s32.totalorder %s180, %s182
      %p186 = scmp.eq.s32.totalorder %s21, 0
      %p187 = por %p185, %p186
      %p188 = scmp.ne.s32.totalorder %s180, %s182
      %p189 = scmp.eq.s32.totalorder %s26, 1
      %p190 = por %p188, %p189
      %p191 = scmp.ne.s32.totalorder %s182, %s183
      %p192 = scmp.eq.s32.totalorder %s26, 0
      %p193 = por %p191, %p192
      %p194 = scmp.ne.s32.totalorder %s182, %s183
      %p195 = scmp.eq.s32.totalorder %s27, 1
      %p196 = por %p194, %p195
      %p198 = scmp.ne.s32.totalorder %s183, %s197
      %p199 = scmp.eq.s32.totalorder %s27, 0
      %p200 = por %p198, %p199
      %s202 = sadd.s32 %s201, 1
      %p205 = scmp.eq.s32.totalorder %s21, 1
      %p206 = scmp.ne.s32.totalorder %s201, %s203
      %p207 = scmp.eq.s32.totalorder %s21, 0
      %p208 = por %p206, %p207
      %p209 = scmp.ne.s32.totalorder %s201, %s203
      %p210 = scmp.eq.s32.totalorder %s26, 1
      %p211 = por %p209, %p210
      %p212 = scmp.ne.s32.totalorder %s203, %s204
      %p213 = scmp.eq.s32.totalorder %s26, 0
      %p214 = por %p212, %p213
      %p215 = scmp.ne.s32.totalorder %s203, %s204
      %p216 = scmp.eq.s32.totalorder %s27, 1
      %p217 = por %p215, %p216
      %p219 = scmp.ne.s32.totalorder %s204, %s218
      %p220 = scmp.eq.s32.totalorder %s27, 0
      %p221 = por %p219, %p220
      %s222 = ssub.s32 %s21, %s28
      %p223 = scmp.eq.s32.totalorder %s222, 0
      %s225 = sadd.s32 %s224, 1
      %s226 = scalar_select %p223, %s224, %s225
      %p229 = pneg %p223
      %p230 = scmp.eq.s32.totalorder %s21, 1
      %p231 = por %p229, %p230
      %p232 = scmp.ne.s32.totalorder %s224, %s227
      %p233 = scmp.eq.s32.totalorder %s21, 0
      %p234 = por %p232, %p233
      %p235 = scmp.ne.s32.totalorder %s224, %s227
      %p236 = scmp.eq.s32.totalorder %s26, 1
      %p237 = por %p235, %p236
      %p238 = scmp.ne.s32.totalorder %s227, %s228
      %p239 = scmp.eq.s32.totalorder %s26, 0
      %p240 = por %p238, %p239
      %p241 = scmp.ne.s32.totalorder %s227, %s228
      %p242 = scmp.eq.s32.totalorder %s27, 1
      %p243 = por %p241, %p242
      %p245 = scmp.ne.s32.totalorder %s228, %s244
      %p246 = scmp.eq.s32.totalorder %s27, 0
      %p247 = por %p245, %p246
      %p248 = scmp.le.s32.totalorder 1, %s21
      %p249 = scmp.lt.s32.totalorder %s21, 3
      %p250 = pnand %p248, %p249
      %p251 = pneg %p250
      // Predicated region
      $region9: #{tpu_custom_call.1} parent=5 // pred_check
        _
      $region10: #{tpu_custom_call.1} parent=5 // pred_check_branch
        %253 = sbr.rel (%p250) target = $region12
      $region11: #{tpu_custom_call.1} parent=5 // pred_region
        %s254 = ssub.s32 %s21, 1
        // Predicated region
        $region13: #{tpu_custom_call.1} parent=11 // pred_check
          %p255 = pneg %p172
        $region14: #{tpu_custom_call.1} parent=11 // pred_check_branch
          %257 = sbr.rel (%p255) target = $region16
        $region15: #{tpu_custom_call.1} parent=11 // pred_region
          _
        $region16: #{tpu_custom_call.1} parent=11 // pred_fallthru
          _
        // Predicated region
        $region17: #{tpu_custom_call.1} parent=11 // pred_check
          %p258 = pneg %p193
        $region18: #{tpu_custom_call.1} parent=11 // pred_check_branch
          %260 = sbr.rel (%p258) target = $region20
        $region19: #{tpu_custom_call.1} parent=11 // pred_region
          %262 = vsyncadd [#allocation6], 0
          %s264 = sshll.u32 %s6, 4
          %s265 = int_to_ptr.hbm [resolvable:$true] %s264
          %s266 = sshll.u32 [#allocation5], 4
          %s267 = int_to_ptr.vmem [resolvable:$true] %s266
          %269 = dma.hbm_to_vmem [thread:$0]  %s265, 128, %s267, [#allocation6]
        $region20: #{tpu_custom_call.1} parent=11 // pred_fallthru
          _
        // Predicated region
        $region21: #{tpu_custom_call.1} parent=11 // pred_check
          %p270 = pneg %p214
        $region22: #{tpu_custom_call.1} parent=11 // pred_check_branch
          %272 = sbr.rel (%p270) target = $region24
        $region23: #{tpu_custom_call.1} parent=11 // pred_region
          %274 = vsyncadd [#allocation6], 0
          %s276 = sshll.u32 %s7, 4
          %s277 = int_to_ptr.hbm [resolvable:$true] %s276
          %s278 = sshll.u32 [#allocation7], 4
          %s279 = int_to_ptr.vmem [resolvable:$true] %s278
          %281 = dma.hbm_to_vmem [thread:$0]  %s277, 128, %s279, [#allocation6]
        $region24: #{tpu_custom_call.1} parent=11 // pred_fallthru
          _
      $region12: #{tpu_custom_call.1} parent=5 // pred_fallthru
        _
      %p282 = scmp.lt.s32.totalorder %s21, 2
      // Predicated region
      $region25: #{tpu_custom_call.1} parent=5 // pred_check
        %p283 = pneg %p282
      $region26: #{tpu_custom_call.1} parent=5 // pred_check_branch
        %285 = sbr.rel (%p283) target = $region28
      $region27: #{tpu_custom_call.1} parent=5 // pred_region
        // Predicated region
        $region29: #{tpu_custom_call.1} parent=27 // pred_check
          %p286 = pneg %p41
        $region30: #{tpu_custom_call.1} parent=27 // pred_check_branch
          %288 = sbr.rel (%p286) target = $region32
        $region31: #{tpu_custom_call.1} parent=27 // pred_region
          %p289 = scmp.lt.s32.totalorder %s21, 1
          %s290 = scalar_select %p289, %s21, 1
          %s291 = smul.addr %s290, 2
          %s292 = smul.addr %s291, 8
          %s293 = scalar_lea.vmem %s0, %s292
        $region32: #{tpu_custom_call.1} parent=27 // pred_fallthru
          _
        // Predicated region
        $region33: #{tpu_custom_call.1} parent=27 // pred_check
          %p294 = pneg %p67
        $region34: #{tpu_custom_call.1} parent=27 // pred_check_branch
          %296 = sbr.rel (%p294) target = $region36
        $region35: #{tpu_custom_call.1} parent=27 // pred_region
          %p297 = scmp.lt.s32.totalorder %s21, 1
          %s298 = scalar_select %p297, %s21, 1
          %s299 = smul.addr %s298, 2
          %s300 = smul.addr %s299, 8
          %s301 = scalar_lea.vmem %s1, %s300
        $region36: #{tpu_custom_call.1} parent=27 // pred_fallthru
          _
        // Predicated region
        $region37: #{tpu_custom_call.1} parent=27 // pred_check
          %p302 = pneg %p93
        $region38: #{tpu_custom_call.1} parent=27 // pred_check_branch
          %304 = sbr.rel (%p302) target = $region40
        $region39: #{tpu_custom_call.1} parent=27 // pred_region
          %p305 = scmp.lt.s32.totalorder %s21, 1
          %s306 = scalar_select %p305, %s21, 1
          %s307 = smul.addr %s306, 2
          %s308 = smul.addr %s307, 8
          %s309 = scalar_lea.vmem %s2, %s308
        $region40: #{tpu_custom_call.1} parent=27 // pred_fallthru
          _
        // Predicated region
        $region41: #{tpu_custom_call.1} parent=27 // pred_check
          %p310 = pneg %p119
        $region42: #{tpu_custom_call.1} parent=27 // pred_check_branch
          %312 = sbr.rel (%p310) target = $region44
        $region43: #{tpu_custom_call.1} parent=27 // pred_region
          %p313 = scmp.lt.s32.totalorder %s21, 1
          %s314 = scalar_select %p313, %s21, 1
          %s315 = smul.addr %s314, 2
          %s316 = smul.addr %s315, 8
          %s317 = scalar_lea.vmem %s3, %s316
        $region44: #{tpu_custom_call.1} parent=27 // pred_fallthru
          _
        // Predicated region
        $region45: #{tpu_custom_call.1} parent=27 // pred_check
          %p318 = pneg %p145
        $region46: #{tpu_custom_call.1} parent=27 // pred_check_branch
          %320 = sbr.rel (%p318) target = $region48
        $region47: #{tpu_custom_call.1} parent=27 // pred_region
          %s321 = sand.u32 %s135, 1
          %s322 = scalar_lea.sflag [#allocation3], %s321
          %s323 = sand.u32 %s135, 1
          %s324 = smul.addr %s323, 16
          %s325 = scalar_lea.vmem [#allocation2], %s324
          %327 = vsyncadd %s322, 0
          %s328 = smul.addr %s21, 2
          %s329 = smul.addr %s328, 8
          %s330 = scalar_lea.hbm %s4, %s329
          %s331 = sshll.u32 %s330, 4
          %s332 = int_to_ptr.hbm [resolvable:$true] %s331
          %s333 = sshll.u32 %s325, 4
          %s334 = int_to_ptr.vmem [resolvable:$true] %s333
          %339 = dma.hbm_to_vmem [thread:$0]  %s332, 256, %s334, %s322, 128, 128, 8
        $region48: #{tpu_custom_call.1} parent=27 // pred_fallthru
          _
      $region28: #{tpu_custom_call.1} parent=5 // pred_fallthru
        _
      %p340 = scmp.le.s32.totalorder 1, %s21
      %p341 = scmp.lt.s32.totalorder %s21, 3
      %p342 = pnand %p340, %p341
      %p343 = pneg %p342
      // Predicated region
      $region49: #{tpu_custom_call.1} parent=5 // pred_check
        _
      $region50: #{tpu_custom_call.1} parent=5 // pred_check_branch
        %345 = sbr.rel (%p342) target = $region52
      $region51: #{tpu_custom_call.1} parent=5 // pred_region
        %s346 = ssub.s32 %s21, 1
        %s347 = sand.u32 %s138, 1
        %s348 = scalar_lea.sflag [#allocation3], %s347
        %s349 = sand.u32 %s138, 1
        %s350 = smul.addr %s349, 16
        %s351 = scalar_lea.vmem [#allocation2], %s350
        // Predicated region
        $region53: #{tpu_custom_call.1} parent=51 // pred_check
          %p352 = pneg %p151
        $region54: #{tpu_custom_call.1} parent=51 // pred_check_branch
          %354 = sbr.rel (%p352) target = $region56
        $region55: #{tpu_custom_call.1} parent=51 // pred_region
          %356 = dma.done %s348, 256
        $region56: #{tpu_custom_call.1} parent=51 // pred_fallthru
          _
        // Predicated region
        $region57: #{tpu_custom_call.1} parent=51 // pred_check
          %p357 = pneg %p193
        $region58: #{tpu_custom_call.1} parent=51 // pred_check_branch
          %359 = sbr.rel (%p357) target = $region60
        $region59: #{tpu_custom_call.1} parent=51 // pred_region
          %361 = dma.done [#allocation6], 128
        $region60: #{tpu_custom_call.1} parent=51 // pred_fallthru
          _
        // Predicated region
        $region61: #{tpu_custom_call.1} parent=51 // pred_check
          %p362 = pneg %p214
        $region62: #{tpu_custom_call.1} parent=51 // pred_check_branch
          %364 = sbr.rel (%p362) target = $region64
        $region63: #{tpu_custom_call.1} parent=51 // pred_region
          %366 = dma.done [#allocation6], 128
        $region64: #{tpu_custom_call.1} parent=51 // pred_fallthru
          _
        %p367 = scmp.lt.s32.totalorder %s26, 1
        %s368 = scalar_select %p367, %s26, 1
        %s369 = smul.addr %s368, 2
        %s370 = smul.addr %s369, 8
        %s371 = scalar_lea.vmem %s0, %s370
        %p372 = pneg %p47
        %p373 = pneg %p44
        %p374 = scmp.lt.s32.totalorder %s26, 1
        %s375 = scalar_select %p374, %s26, 1
        %s376 = smul.addr %s375, 2
        %s377 = smul.addr %s376, 8
        %s378 = scalar_lea.vmem %s1, %s377
        %p379 = pneg %p73
        %p380 = pneg %p70
        %p381 = scmp.lt.s32.totalorder %s26, 1
        %s382 = scalar_select %p381, %s26, 1
        %s383 = smul.addr %s382, 2
        %s384 = smul.addr %s383, 8
        %s385 = scalar_lea.vmem %s2, %s384
        %p386 = pneg %p99
        %p387 = pneg %p96
        %p388 = scmp.lt.s32.totalorder %s26, 1
        %s389 = scalar_select %p388, %s26, 1
        %s390 = smul.addr %s389, 2
        %s391 = smul.addr %s390, 8
        %s392 = scalar_lea.vmem %s3, %s391
        %p393 = pneg %p125
        %p394 = pneg %p122
        %s395 = sand.u32 %s138, 1
        %s396 = scalar_lea.sflag [#allocation3], %s395
        %s397 = sand.u32 %s138, 1
        %s398 = smul.addr %s397, 16
        %s399 = scalar_lea.vmem [#allocation2], %s398
        %p400 = pneg %p151
        %p401 = pneg %p148
        %p402 = pneg %p172
        %p403 = pneg %p169
        %p404 = pneg %p193
        %p405 = pneg %p190
        %p406 = pneg %p214
        %p407 = pneg %p211
        %p408 = pneg %p240
        %p409 = pneg %p237
        %s410 = sand.u32 %s227, 1
        %s411 = scalar_lea.sflag [#allocation4], %s410
        %s412 = sand.u32 %s227, 1
        %s413 = smul.addr %s412, 32
        %s414 = scalar_lea.vmem [#allocation8], %s413
        %p415 = scmp.lt.s32.totalorder %s26, 1
        %s416 = scalar_select %p415, %s26, 1
        %s417 = smul.addr %s416, 2
        %s418 = smul.addr %s417, 8
        %s419 = scalar_lea.vmem %s0, %s418
        %p420 = scmp.lt.s32.totalorder %s26, 1
        %s421 = scalar_select %p420, %s26, 1
        %s422 = smul.addr %s421, 2
        %s423 = smul.addr %s422, 8
        %s424 = scalar_lea.vmem %s1, %s423
        %p425 = scmp.lt.s32.totalorder %s26, 1
        %s426 = scalar_select %p425, %s26, 1
        %s427 = smul.addr %s426, 2
        %s428 = smul.addr %s427, 8
        %s429 = scalar_lea.vmem %s2, %s428
        %p430 = scmp.lt.s32.totalorder %s26, 1
        %s431 = scalar_select %p430, %s26, 1
        %s432 = smul.addr %s431, 2
        %s433 = smul.addr %s432, 8
        %s434 = scalar_lea.vmem %s3, %s433
        %v435 = vld [vmem:[%s419] sm:$0xff]
        %v436 = vld [vmem:[%s419 + $0x8] sm:$0xff]
        %v437 = vld [vmem:[%s424] sm:$0xff]
        %v438 = vld [vmem:[%s424 + $0x8] sm:$0xff]
        %v439 = vmul.f32 %v435, %v437
        %v440 = vmul.f32 %v436, %v438
        %v441 = vmul.f32 %v439, 1.1111112
        %v442 = vmul.f32 %v440, 1.1111112
        %v443 = vld [vmem:[%s5] sm:$0xff]
        %v444 = vld [vmem:[%s5 + $0x8] sm:$0xff]
        %vm445 = vcmask 64512
        %v447 = vsel %vm445, %v441, 0
        %v450 = vsel %vm445, %v442, 0
        %452 = vmatpush.msra.mxu0 0.0
        %453 = vmatpush.msra.mxu0 0.0
        %454 = vmatpush.msra.mxu0 0.0
        %455 = vmatpush.msra.mxu0 0.0
        %456 = vmatpush.msra.mxu0 0.0
        %457 = vmatpush.msra.mxu0 0.0
        %458 = vmatpush.msra.mxu0 0.0
        %459 = vmatpush.msra.mxu0 0.0
        %460 = vmatpush.msra.mxu0 0.0
        %461 = vmatpush.msra.mxu0 0.0
        %462 = vmatpush.msra.mxu0 0.0
        %463 = vmatpush.msra.mxu0 0.0
        %464 = vmatpush.msra.mxu0 0.0
        %465 = vmatpush.msra.mxu0 0.0
        %466 = vmatpush.msra.mxu0 0.0
        %467 = vmatpush.msra.mxu0 %v443
        %468 = vmatmul.f32.gmra.mxu0 %v447
        %v469 = vpop.f32.mrf.mxu0
        %v470 = vadd.f32 0.0, %v469
        %471 = vmatmul.f32.gmra.mxu0 %v450
        %v472 = vpop.f32.mrf.mxu0
        %v473 = vadd.f32 0.0, %v472
        %474 = vdwg.mxu0
        %475 = vmatpush.msra.mxu0 0.0
        %476 = vmatpush.msra.mxu0 0.0
        %477 = vmatpush.msra.mxu0 0.0
        %478 = vmatpush.msra.mxu0 0.0
        %479 = vmatpush.msra.mxu0 0.0
        %480 = vmatpush.msra.mxu0 0.0
        %481 = vmatpush.msra.mxu0 0.0
        %482 = vmatpush.msra.mxu0 0.0
        %483 = vmatpush.msra.mxu0 0.0
        %484 = vmatpush.msra.mxu0 0.0
        %485 = vmatpush.msra.mxu0 0.0
        %486 = vmatpush.msra.mxu0 0.0
        %487 = vmatpush.msra.mxu0 0.0
        %488 = vmatpush.msra.mxu0 0.0
        %489 = vmatpush.msra.mxu0 0.0
        %490 = vmatpush.msra.mxu0 %v444
        %491 = vmatmul.f32.gmra.mxu0 %v447
        %v492 = vpop.f32.mrf.mxu0
        %v493 = vadd.f32 0.0, %v492
        %494 = vmatmul.f32.gmra.mxu0 %v450
        %v495 = vpop.f32.mrf.mxu0
        %v496 = vadd.f32 0.0, %v495
        %497 = vdwg.mxu0
        %v498 = vld [vmem:[%s429] sm:$0xff]
        %v499 = vld [vmem:[%s429 + $0x8] sm:$0xff]
        %vm500 = vcmp.gt.f32.partialorder %v498, 0.0
        %vm501 = vcmp.gt.f32.partialorder %v499, 0.0
        %v502 = vld [vmem:[#allocation5] sm:$0x1]
        %v503 = vld [vmem:[#allocation7] sm:$0x1]
        %506 = vrot.lane.b32.xlu0 %v470, 96
        %v507 = vpop.permute.xlu0 %506
        %508 = vrot.lane.b32.xlu0 %v473, 96
        %v509 = vpop.permute.xlu0 %508
        %vm510 = vcmask 261120
        %v512 = vsel %vm510, %v502, 0
        %v514 = vsel %vm510, %v507, 0
        %v516 = vsel %vm510, %v509, 0
        %518 = vmatpush.xpose.msra.mxu0 0.0
        %519 = vmatpush.xpose.msra.mxu0 0.0
        %520 = vmatpush.xpose.msra.mxu0 0.0
        %521 = vmatpush.xpose.msra.mxu0 0.0
        %522 = vmatpush.xpose.msra.mxu0 0.0
        %523 = vmatpush.xpose.msra.mxu0 0.0
        %524 = vmatpush.xpose.msra.mxu0 0.0
        %525 = vmatpush.xpose.msra.mxu0 0.0
        %526 = vmatpush.xpose.msra.mxu0 0.0
        %527 = vmatpush.xpose.msra.mxu0 0.0
        %528 = vmatpush.xpose.msra.mxu0 0.0
        %529 = vmatpush.xpose.msra.mxu0 0.0
        %530 = vmatpush.xpose.msra.mxu0 0.0
        %531 = vmatpush.xpose.msra.mxu0 0.0
        %532 = vmatpush.xpose.msra.mxu0 %v516
        %533 = vmatpush.xpose.msra.mxu0 %v514
        %534 = vmatmul.f32.gmra.mxu0 %v512
        %v535 = vpop.f32.mrf.mxu0
        %v536 = vadd.f32 0.0, %v535
        %537 = vdwg.mxu0
        %v538 = vperm.slane %v503, 0
        %540 = vrot.lane.b32.xlu0 %v538, 32
        %v541 = vpop.permute.xlu0 %540
        %v543 = vmul.f32 %v470, %v541
        %v544 = vmul.f32 %v473, %v541
        %547 = vrot.lane.b32.xlu0 %v543, 96
        %v548 = vpop.permute.xlu0 %547
        %549 = vrot.lane.b32.xlu0 %v544, 96
        %v550 = vpop.permute.xlu0 %549
        %v553 = vsel %vm510, %v548, 0.0
        %554 = vadd.xlane.f32.xlu0 %v553
        %v555 = vpop.xlane.xlu0 %554
        %v556 = vsel %vm510, %v550, 0.0
        %557 = vadd.xlane.f32.xlu0 %v556
        %v558 = vpop.xlane.xlu0 %557
        %v559 = vperm.slane %v536, 0
        %v560 = vmul.f32 %v498, %v559
        %v561 = vmul.f32 %v499, %v559
        %v562 = vadd.f32 %v560, %v555
        %v563 = vadd.f32 %v561, %v558
        %vm564 = vcmp.gt.f32.partialorder %v562, 0.0
        %vm565 = vcmp.gt.f32.partialorder %v563, 0.0
        %v566 = vmul.f32 %v562, 0.2
        %v567 = vmul.f32 %v563, 0.2
        %v568 = vsel %vm564, %v562, %v566
        %v569 = vsel %vm565, %v563, %v567
        %v570 = vsel %vm500, %v568, -1e+30
        %v571 = vsel %vm501, %v569, -1e+30
        %vm572 = vcmask 130048
        %v573 = vsel %vm572, %v570, -inf
        %574 = vmax.xlane.f32.xlu0 %v573
        %v575 = vpop.xlane.xlu0 %574
        %v576 = vsel %vm572, %v571, -inf
        %577 = vmax.xlane.f32.xlu0 %v576
        %v578 = vpop.xlane.xlu0 %577
        %vm579 = vcmp.gt.f32.partialorder %v575, -1e+29
        %vm580 = vcmp.gt.f32.partialorder %v578, -1e+29
        %v581 = vsel %vm579, %v575, 0.0
        %v582 = vsel %vm580, %v578, 0.0
        %v583 = vsub.f32 %v570, %v581
        %v584 = vsub.f32 %v571, %v582
        %v585 = vmul.f32 %v583, 1.442695
        %v586 = vpow.pop %v585
        %v587 = vmul.f32 %v584, 1.442695
        %v588 = vpow.pop %v587
        %v589 = vsel %vm500, %v586, 0.0
        %v590 = vsel %vm501, %v588, 0.0
        %v591 = vsel %vm572, %v589, 0.0
        %592 = vadd.xlane.f32.xlu0 %v591
        %v593 = vpop.xlane.xlu0 %592
        %v594 = vsel %vm572, %v590, 0.0
        %595 = vadd.xlane.f32.xlu0 %v594
        %v596 = vpop.xlane.xlu0 %595
        %v597 = vmax.f32 %v593, 1e-09
        %v598 = vmax.f32 %v596, 1e-09
        %v599 = vrcp.pop %v597
        %v600 = vmul.f32 %v597, %v599
        %v601 = vsub.f32 1.0, %v600
        %v602 = vmul.f32 %v599, %v601
        %v603 = vadd.f32 %v599, %v602
        %vm604 = vweird.f32 %v597
        %vm605 = vweird.f32 %v599
        %vm606 = vmor %vm604, %vm605
        %v607 = vsel %vm606, %v599, %v603
        %v608 = vand.u32 2147483647, %v597
        %vm609 = vcmp.eq.f32.partialorder %v608, 8.507059e+37
        %v610 = vand.u32 %v597, 2147483648
        %v611 = vor.u32 1.1754944e-38, %v610
        %v612 = vsel %vm609, %v611, %v607
        %v613 = vmul.f32 %v589, %v612
        %v614 = vrcp.pop %v598
        %v615 = vmul.f32 %v598, %v614
        %v616 = vsub.f32 1.0, %v615
        %v617 = vmul.f32 %v614, %v616
        %v618 = vadd.f32 %v614, %v617
        %vm619 = vweird.f32 %v598
        %vm620 = vweird.f32 %v614
        %vm621 = vmor %vm619, %vm620
        %v622 = vsel %vm621, %v614, %v618
        %v623 = vand.u32 2147483647, %v598
        %vm624 = vcmp.eq.f32.partialorder %v623, 8.507059e+37
        %v625 = vand.u32 %v598, 2147483648
        %v626 = vor.u32 1.1754944e-38, %v625
        %v627 = vsel %vm624, %v626, %v622
        %v628 = vmul.f32 %v590, %v627
        %v629 = vmul.f32 %v613, %v498
        %v630 = vmul.f32 %v628, %v499
        %v634 = vsel %vm572, %v629, 0
        %v637 = vsel %vm572, %v630, 0
        %639 = vmatpush.msra.mxu0 0.0
        %640 = vmatpush.msra.mxu0 0.0
        %641 = vmatpush.msra.mxu0 0.0
        %642 = vmatpush.msra.mxu0 0.0
        %643 = vmatpush.msra.mxu0 0.0
        %644 = vmatpush.msra.mxu0 0.0
        %645 = vmatpush.msra.mxu0 0.0
        %646 = vmatpush.msra.mxu0 0.0
        %647 = vmatpush.msra.mxu0 0.0
        %648 = vmatpush.msra.mxu0 0.0
        %649 = vmatpush.msra.mxu0 0.0
        %650 = vmatpush.msra.mxu0 0.0
        %651 = vmatpush.msra.mxu0 0.0
        %652 = vmatpush.msra.mxu0 0.0
        %653 = vmatpush.msra.mxu0 %v509
        %654 = vmatpush.msra.mxu0 %v507
        %655 = vmatmul.f32.gmra.mxu0 %v634
        %v656 = vpop.f32.mrf.mxu0
        %v657 = vadd.f32 0.0, %v656
        %658 = vmatmul.f32.gmra.mxu0 %v637
        %v659 = vpop.f32.mrf.mxu0
        %v660 = vadd.f32 0.0, %v659
        %661 = vdwg.mxu0
        %v662 = vld [vmem:[#allocation5 + $0x1] sm:$0x1]
        %v663 = vld [vmem:[#allocation7 + $0x1] sm:$0x1]
        %664 = vrot.lane.b32.xlu0 %v470, 64
        %v665 = vpop.permute.xlu0 %664
        %666 = vrot.lane.b32.xlu0 %v473, 64
        %v667 = vpop.permute.xlu0 %666
        %v669 = vsel %vm510, %v662, 0
        %v671 = vsel %vm510, %v665, 0
        %v673 = vsel %vm510, %v667, 0
        %675 = vmatpush.xpose.msra.mxu0 0.0
        %676 = vmatpush.xpose.msra.mxu0 0.0
        %677 = vmatpush.xpose.msra.mxu0 0.0
        %678 = vmatpush.xpose.msra.mxu0 0.0
        %679 = vmatpush.xpose.msra.mxu0 0.0
        %680 = vmatpush.xpose.msra.mxu0 0.0
        %681 = vmatpush.xpose.msra.mxu0 0.0
        %682 = vmatpush.xpose.msra.mxu0 0.0
        %683 = vmatpush.xpose.msra.mxu0 0.0
        %684 = vmatpush.xpose.msra.mxu0 0.0
        %685 = vmatpush.xpose.msra.mxu0 0.0
        %686 = vmatpush.xpose.msra.mxu0 0.0
        %687 = vmatpush.xpose.msra.mxu0 0.0
        %688 = vmatpush.xpose.msra.mxu0 0.0
        %689 = vmatpush.xpose.msra.mxu0 %v673
        %690 = vmatpush.xpose.msra.mxu0 %v671
        %691 = vmatmul.f32.gmra.mxu0 %v669
        %v692 = vpop.f32.mrf.mxu0
        %v693 = vadd.f32 0.0, %v692
        %694 = vdwg.mxu0
        %v695 = vperm.slane %v663, 0
        %697 = vrot.lane.b32.xlu0 %v695, 64
        %v698 = vpop.permute.xlu0 %697
        %v700 = vmul.f32 %v470, %v698
        %v701 = vmul.f32 %v473, %v698
        %704 = vrot.lane.b32.xlu0 %v700, 64
        %v705 = vpop.permute.xlu0 %704
        %706 = vrot.lane.b32.xlu0 %v701, 64
        %v707 = vpop.permute.xlu0 %706
        %v710 = vsel %vm510, %v705, 0.0
        %711 = vadd.xlane.f32.xlu0 %v710
        %v712 = vpop.xlane.xlu0 %711
        %v713 = vsel %vm510, %v707, 0.0
        %714 = vadd.xlane.f32.xlu0 %v713
        %v715 = vpop.xlane.xlu0 %714
        %v716 = vperm.slane %v693, 0
        %v717 = vmul.f32 %v498, %v716
        %v718 = vmul.f32 %v499, %v716
        %v719 = vadd.f32 %v717, %v712
        %v720 = vadd.f32 %v718, %v715
        %vm721 = vcmp.gt.f32.partialorder %v719, 0.0
        %vm722 = vcmp.gt.f32.partialorder %v720, 0.0
        %v723 = vmul.f32 %v719, 0.2
        %v724 = vmul.f32 %v720, 0.2
        %v725 = vsel %vm721, %v719, %v723
        %v726 = vsel %vm722, %v720, %v724
        %v727 = vsel %vm500, %v725, -1e+30
        %v728 = vsel %vm501, %v726, -1e+30
        %v729 = vsel %vm572, %v727, -inf
        %730 = vmax.xlane.f32.xlu0 %v729
        %v731 = vpop.xlane.xlu0 %730
        %v732 = vsel %vm572, %v728, -inf
        %733 = vmax.xlane.f32.xlu0 %v732
        %v734 = vpop.xlane.xlu0 %733
        %vm735 = vcmp.gt.f32.partialorder %v731, -1e+29
        %vm736 = vcmp.gt.f32.partialorder %v734, -1e+29
        %v737 = vsel %vm735, %v731, 0.0
        %v738 = vsel %vm736, %v734, 0.0
        %v739 = vsub.f32 %v727, %v737
        %v740 = vsub.f32 %v728, %v738
        %v741 = vmul.f32 %v739, 1.442695
        %v742 = vpow.pop %v741
        %v743 = vmul.f32 %v740, 1.442695
        %v744 = vpow.pop %v743
        %v745 = vsel %vm500, %v742, 0.0
        %v746 = vsel %vm501, %v744, 0.0
        %v747 = vsel %vm572, %v745, 0.0
        %748 = vadd.xlane.f32.xlu0 %v747
        %v749 = vpop.xlane.xlu0 %748
        %v750 = vsel %vm572, %v746, 0.0
        %751 = vadd.xlane.f32.xlu0 %v750
        %v752 = vpop.xlane.xlu0 %751
        %v753 = vmax.f32 %v749, 1e-09
        %v754 = vmax.f32 %v752, 1e-09
        %v755 = vrcp.pop %v753
        %v756 = vmul.f32 %v753, %v755
        %v757 = vsub.f32 1.0, %v756
        %v758 = vmul.f32 %v755, %v757
        %v759 = vadd.f32 %v755, %v758
        %vm760 = vweird.f32 %v753
        %vm761 = vweird.f32 %v755
        %vm762 = vmor %vm760, %vm761
        %v763 = vsel %vm762, %v755, %v759
        %v764 = vand.u32 2147483647, %v753
        %vm765 = vcmp.eq.f32.partialorder %v764, 8.507059e+37
        %v766 = vand.u32 %v753, 2147483648
        %v767 = vor.u32 1.1754944e-38, %v766
        %v768 = vsel %vm765, %v767, %v763
        %v769 = vmul.f32 %v745, %v768
        %v770 = vrcp.pop %v754
        %v771 = vmul.f32 %v754, %v770
        %v772 = vsub.f32 1.0, %v771
        %v773 = vmul.f32 %v770, %v772
        %v774 = vadd.f32 %v770, %v773
        %vm775 = vweird.f32 %v754
        %vm776 = vweird.f32 %v770
        %vm777 = vmor %vm775, %vm776
        %v778 = vsel %vm777, %v770, %v774
        %v779 = vand.u32 2147483647, %v754
        %vm780 = vcmp.eq.f32.partialorder %v779, 8.507059e+37
        %v781 = vand.u32 %v754, 2147483648
        %v782 = vor.u32 1.1754944e-38, %v781
        %v783 = vsel %vm780, %v782, %v778
        %v784 = vmul.f32 %v746, %v783
        %v785 = vmul.f32 %v769, %v498
        %v786 = vmul.f32 %v784, %v499
        %v790 = vsel %vm572, %v785, 0
        %v793 = vsel %vm572, %v786, 0
        %795 = vmatpush.msra.mxu0 0.0
        %796 = vmatpush.msra.mxu0 0.0
        %797 = vmatpush.msra.mxu0 0.0
        %798 = vmatpush.msra.mxu0 0.0
        %799 = vmatpush.msra.mxu0 0.0
        %800 = vmatpush.msra.mxu0 0.0
        %801 = vmatpush.msra.mxu0 0.0
        %802 = vmatpush.msra.mxu0 0.0
        %803 = vmatpush.msra.mxu0 0.0
        %804 = vmatpush.msra.mxu0 0.0
        %805 = vmatpush.msra.mxu0 0.0
        %806 = vmatpush.msra.mxu0 0.0
        %807 = vmatpush.msra.mxu0 0.0
        %808 = vmatpush.msra.mxu0 0.0
        %809 = vmatpush.msra.mxu0 %v667
        %810 = vmatpush.msra.mxu0 %v665
        %811 = vmatmul.f32.gmra.mxu0 %v790
        %v812 = vpop.f32.mrf.mxu0
        %v813 = vadd.f32 0.0, %v812
        %814 = vmatmul.f32.gmra.mxu0 %v793
        %v815 = vpop.f32.mrf.mxu0
        %v816 = vadd.f32 0.0, %v815
        %817 = vdwg.mxu0
        %v818 = vld [vmem:[%s434] sm:$0xff]
        %v819 = vld [vmem:[%s434 + $0x8] sm:$0xff]
        %vm820 = vcmp.gt.f32.partialorder %v818, 0.0
        %vm821 = vcmp.gt.f32.partialorder %v819, 0.0
        %v822 = vld [vmem:[#allocation5 + $0x2] sm:$0x1]
        %v823 = vld [vmem:[#allocation7 + $0x2] sm:$0x1]
        %824 = vrot.lane.b32.xlu0 %v470, 32
        %v825 = vpop.permute.xlu0 %824
        %826 = vrot.lane.b32.xlu0 %v473, 32
        %v827 = vpop.permute.xlu0 %826
        %v829 = vsel %vm510, %v822, 0
        %v831 = vsel %vm510, %v825, 0
        %v833 = vsel %vm510, %v827, 0
        %835 = vmatpush.xpose.msra.mxu0 0.0
        %836 = vmatpush.xpose.msra.mxu0 0.0
        %837 = vmatpush.xpose.msra.mxu0 0.0
        %838 = vmatpush.xpose.msra.mxu0 0.0
        %839 = vmatpush.xpose.msra.mxu0 0.0
        %840 = vmatpush.xpose.msra.mxu0 0.0
        %841 = vmatpush.xpose.msra.mxu0 0.0
        %842 = vmatpush.xpose.msra.mxu0 0.0
        %843 = vmatpush.xpose.msra.mxu0 0.0
        %844 = vmatpush.xpose.msra.mxu0 0.0
        %845 = vmatpush.xpose.msra.mxu0 0.0
        %846 = vmatpush.xpose.msra.mxu0 0.0
        %847 = vmatpush.xpose.msra.mxu0 0.0
        %848 = vmatpush.xpose.msra.mxu0 0.0
        %849 = vmatpush.xpose.msra.mxu0 %v833
        %850 = vmatpush.xpose.msra.mxu0 %v831
        %851 = vmatmul.f32.gmra.mxu0 %v829
        %v852 = vpop.f32.mrf.mxu0
        %v853 = vadd.f32 0.0, %v852
        %854 = vdwg.mxu0
        %v855 = vperm.slane %v823, 0
        %857 = vrot.lane.b32.xlu0 %v855, 96
        %v858 = vpop.permute.xlu0 %857
        %v860 = vmul.f32 %v470, %v858
        %v861 = vmul.f32 %v473, %v858
        %864 = vrot.lane.b32.xlu0 %v860, 32
        %v865 = vpop.permute.xlu0 %864
        %866 = vrot.lane.b32.xlu0 %v861, 32
        %v867 = vpop.permute.xlu0 %866
        %v870 = vsel %vm510, %v865, 0.0
        %871 = vadd.xlane.f32.xlu0 %v870
        %v872 = vpop.xlane.xlu0 %871
        %v873 = vsel %vm510, %v867, 0.0
        %874 = vadd.xlane.f32.xlu0 %v873
        %v875 = vpop.xlane.xlu0 %874
        %v876 = vperm.slane %v853, 0
        %v877 = vmul.f32 %v818, %v876
        %v878 = vmul.f32 %v819, %v876
        %v879 = vadd.f32 %v877, %v872
        %v880 = vadd.f32 %v878, %v875
        %vm881 = vcmp.gt.f32.partialorder %v879, 0.0
        %vm882 = vcmp.gt.f32.partialorder %v880, 0.0
        %v883 = vmul.f32 %v879, 0.2
        %v884 = vmul.f32 %v880, 0.2
        %v885 = vsel %vm881, %v879, %v883
        %v886 = vsel %vm882, %v880, %v884
        %v887 = vsel %vm820, %v885, -1e+30
        %v888 = vsel %vm821, %v886, -1e+30
        %v889 = vsel %vm572, %v887, -inf
        %890 = vmax.xlane.f32.xlu0 %v889
        %v891 = vpop.xlane.xlu0 %890
        %v892 = vsel %vm572, %v888, -inf
        %893 = vmax.xlane.f32.xlu0 %v892
        %v894 = vpop.xlane.xlu0 %893
        %vm895 = vcmp.gt.f32.partialorder %v891, -1e+29
        %vm896 = vcmp.gt.f32.partialorder %v894, -1e+29
        %v897 = vsel %vm895, %v891, 0.0
        %v898 = vsel %vm896, %v894, 0.0
        %v899 = vsub.f32 %v887, %v897
        %v900 = vsub.f32 %v888, %v898
        %v901 = vmul.f32 %v899, 1.442695
        %v902 = vpow.pop %v901
        %v903 = vmul.f32 %v900, 1.442695
        %v904 = vpow.pop %v903
        %v905 = vsel %vm820, %v902, 0.0
        %v906 = vsel %vm821, %v904, 0.0
        %v907 = vsel %vm572, %v905, 0.0
        %908 = vadd.xlane.f32.xlu0 %v907
        %v909 = vpop.xlane.xlu0 %908
        %v910 = vsel %vm572, %v906, 0.0
        %911 = vadd.xlane.f32.xlu0 %v910
        %v912 = vpop.xlane.xlu0 %911
        %v913 = vmax.f32 %v909, 1e-09
        %v914 = vmax.f32 %v912, 1e-09
        %v915 = vrcp.pop %v913
        %v916 = vmul.f32 %v913, %v915
        %v917 = vsub.f32 1.0, %v916
        %v918 = vmul.f32 %v915, %v917
        %v919 = vadd.f32 %v915, %v918
        %vm920 = vweird.f32 %v913
        %vm921 = vweird.f32 %v915
        %vm922 = vmor %vm920, %vm921
        %v923 = vsel %vm922, %v915, %v919
        %v924 = vand.u32 2147483647, %v913
        %vm925 = vcmp.eq.f32.partialorder %v924, 8.507059e+37
        %v926 = vand.u32 %v913, 2147483648
        %v927 = vor.u32 1.1754944e-38, %v926
        %v928 = vsel %vm925, %v927, %v923
        %v929 = vmul.f32 %v905, %v928
        %v930 = vrcp.pop %v914
        %v931 = vmul.f32 %v914, %v930
        %v932 = vsub.f32 1.0, %v931
        %v933 = vmul.f32 %v930, %v932
        %v934 = vadd.f32 %v930, %v933
        %vm935 = vweird.f32 %v914
        %vm936 = vweird.f32 %v930
        %vm937 = vmor %vm935, %vm936
        %v938 = vsel %vm937, %v930, %v934
        %v939 = vand.u32 2147483647, %v914
        %vm940 = vcmp.eq.f32.partialorder %v939, 8.507059e+37
        %v941 = vand.u32 %v914, 2147483648
        %v942 = vor.u32 1.1754944e-38, %v941
        %v943 = vsel %vm940, %v942, %v938
        %v944 = vmul.f32 %v906, %v943
        %v945 = vmul.f32 %v929, %v818
        %v946 = vmul.f32 %v944, %v819
        %v950 = vsel %vm572, %v945, 0
        %v953 = vsel %vm572, %v946, 0
        %955 = vmatpush.msra.mxu0 0.0
        %956 = vmatpush.msra.mxu0 0.0
        %957 = vmatpush.msra.mxu0 0.0
        %958 = vmatpush.msra.mxu0 0.0
        %959 = vmatpush.msra.mxu0 0.0
        %960 = vmatpush.msra.mxu0 0.0
        %961 = vmatpush.msra.mxu0 0.0
        %962 = vmatpush.msra.mxu0 0.0
        %963 = vmatpush.msra.mxu0 0.0
        %964 = vmatpush.msra.mxu0 0.0
        %965 = vmatpush.msra.mxu0 0.0
        %966 = vmatpush.msra.mxu0 0.0
        %967 = vmatpush.msra.mxu0 0.0
        %968 = vmatpush.msra.mxu0 0.0
        %969 = vmatpush.msra.mxu0 %v827
        %970 = vmatpush.msra.mxu0 %v825
        %971 = vmatmul.f32.gmra.mxu0 %v950
        %v972 = vpop.f32.mrf.mxu0
        %v973 = vadd.f32 0.0, %v972
        %974 = vmatmul.f32.gmra.mxu0 %v953
        %v975 = vpop.f32.mrf.mxu0
        %v976 = vadd.f32 0.0, %v975
        %977 = vdwg.mxu0
        %v978 = vld [vmem:[#allocation5 + $0x3] sm:$0x1]
        %v979 = vld [vmem:[#allocation7 + $0x3] sm:$0x1]
        %v981 = vsel %vm510, %v978, 0
        %v984 = vsel %vm510, %v493, 0
        %v987 = vsel %vm510, %v496, 0
        %989 = vmatpush.xpose.msra.mxu0 0.0
        %990 = vmatpush.xpose.msra.mxu0 0.0
        %991 = vmatpush.xpose.msra.mxu0 0.0
        %992 = vmatpush.xpose.msra.mxu0 0.0
        %993 = vmatpush.xpose.msra.mxu0 0.0
        %994 = vmatpush.xpose.msra.mxu0 0.0
        %995 = vmatpush.xpose.msra.mxu0 0.0
        %996 = vmatpush.xpose.msra.mxu0 0.0
        %997 = vmatpush.xpose.msra.mxu0 0.0
        %998 = vmatpush.xpose.msra.mxu0 0.0
        %999 = vmatpush.xpose.msra.mxu0 0.0
        %1000 = vmatpush.xpose.msra.mxu0 0.0
        %1001 = vmatpush.xpose.msra.mxu0 0.0
        %1002 = vmatpush.xpose.msra.mxu0 0.0
        %1003 = vmatpush.xpose.msra.mxu0 %v987
        %1004 = vmatpush.xpose.msra.mxu0 %v984
        %1005 = vmatmul.f32.gmra.mxu0 %v981
        %v1006 = vpop.f32.mrf.mxu0
        %v1007 = vadd.f32 0.0, %v1006
        %1008 = vdwg.mxu0
        %v1009 = vperm.slane %v979, 0
        %v1010 = vmul.f32 %v493, %v1009
        %v1011 = vmul.f32 %v496, %v1009
        %v1012 = vsel %vm510, %v1010, 0.0
        %1013 = vadd.xlane.f32.xlu0 %v1012
        %v1014 = vpop.xlane.xlu0 %1013
        %v1015 = vsel %vm510, %v1011, 0.0
        %1016 = vadd.xlane.f32.xlu0 %v1015
        %v1017 = vpop.xlane.xlu0 %1016
        %v1018 = vperm.slane %v1007, 0
        %v1019 = vmul.f32 %v818, %v1018
        %v1020 = vmul.f32 %v819, %v1018
        %v1021 = vadd.f32 %v1019, %v1014
        %v1022 = vadd.f32 %v1020, %v1017
        %vm1023 = vcmp.gt.f32.partialorder %v1021, 0.0
        %vm1024 = vcmp.gt.f32.partialorder %v1022, 0.0
        %v1025 = vmul.f32 %v1021, 0.2
        %v1026 = vmul.f32 %v1022, 0.2
        %v1027 = vsel %vm1023, %v1021, %v1025
        %v1028 = vsel %vm1024, %v1022, %v1026
        %v1029 = vsel %vm820, %v1027, -1e+30
        %v1030 = vsel %vm821, %v1028, -1e+30
        %v1031 = vsel %vm572, %v1029, -inf
        %1032 = vmax.xlane.f32.xlu0 %v1031
        %v1033 = vpop.xlane.xlu0 %1032
        %v1034 = vsel %vm572, %v1030, -inf
        %1035 = vmax.xlane.f32.xlu0 %v1034
        %v1036 = vpop.xlane.xlu0 %1035
        %vm1037 = vcmp.gt.f32.partialorder %v1033, -1e+29
        %vm1038 = vcmp.gt.f32.partialorder %v1036, -1e+29
        %v1039 = vsel %vm1037, %v1033, 0.0
        %v1040 = vsel %vm1038, %v1036, 0.0
        %v1041 = vsub.f32 %v1029, %v1039
        %v1042 = vsub.f32 %v1030, %v1040
        %v1043 = vmul.f32 %v1041, 1.442695
        %v1044 = vpow.pop %v1043
        %v1045 = vmul.f32 %v1042, 1.442695
        %v1046 = vpow.pop %v1045
        %v1047 = vsel %vm820, %v1044, 0.0
        %v1048 = vsel %vm821, %v1046, 0.0
        %v1049 = vsel %vm572, %v1047, 0.0
        %1050 = vadd.xlane.f32.xlu0 %v1049
        %v1051 = vpop.xlane.xlu0 %1050
        %v1052 = vsel %vm572, %v1048, 0.0
        %1053 = vadd.xlane.f32.xlu0 %v1052
        %v1054 = vpop.xlane.xlu0 %1053
        %v1055 = vmax.f32 %v1051, 1e-09
        %v1056 = vmax.f32 %v1054, 1e-09
        %v1057 = vrcp.pop %v1055
        %v1058 = vmul.f32 %v1055, %v1057
        %v1059 = vsub.f32 1.0, %v1058
        %v1060 = vmul.f32 %v1057, %v1059
        %v1061 = vadd.f32 %v1057, %v1060
        %vm1062 = vweird.f32 %v1055
        %vm1063 = vweird.f32 %v1057
        %vm1064 = vmor %vm1062, %vm1063
        %v1065 = vsel %vm1064, %v1057, %v1061
        %v1066 = vand.u32 2147483647, %v1055
        %vm1067 = vcmp.eq.f32.partialorder %v1066, 8.507059e+37
        %v1068 = vand.u32 %v1055, 2147483648
        %v1069 = vor.u32 1.1754944e-38, %v1068
        %v1070 = vsel %vm1067, %v1069, %v1065
        %v1071 = vmul.f32 %v1047, %v1070
        %v1072 = vrcp.pop %v1056
        %v1073 = vmul.f32 %v1056, %v1072
        %v1074 = vsub.f32 1.0, %v1073
        %v1075 = vmul.f32 %v1072, %v1074
        %v1076 = vadd.f32 %v1072, %v1075
        %vm1077 = vweird.f32 %v1056
        %vm1078 = vweird.f32 %v1072
        %vm1079 = vmor %vm1077, %vm1078
        %v1080 = vsel %vm1079, %v1072, %v1076
        %v1081 = vand.u32 2147483647, %v1056
        %vm1082 = vcmp.eq.f32.partialorder %v1081, 8.507059e+37
        %v1083 = vand.u32 %v1056, 2147483648
        %v1084 = vor.u32 1.1754944e-38, %v1083
        %v1085 = vsel %vm1082, %v1084, %v1080
        %v1086 = vmul.f32 %v1048, %v1085
        %v1087 = vmul.f32 %v1071, %v818
        %v1088 = vmul.f32 %v1086, %v819
        %v1090 = vsel %vm572, %v1087, 0
        %v1093 = vsel %vm572, %v1088, 0
        %1095 = vmatpush.msra.mxu0 0.0
        %1096 = vmatpush.msra.mxu0 0.0
        %1097 = vmatpush.msra.mxu0 0.0
        %1098 = vmatpush.msra.mxu0 0.0
        %1099 = vmatpush.msra.mxu0 0.0
        %1100 = vmatpush.msra.mxu0 0.0
        %1101 = vmatpush.msra.mxu0 0.0
        %1102 = vmatpush.msra.mxu0 0.0
        %1103 = vmatpush.msra.mxu0 0.0
        %1104 = vmatpush.msra.mxu0 0.0
        %1105 = vmatpush.msra.mxu0 0.0
        %1106 = vmatpush.msra.mxu0 0.0
        %1107 = vmatpush.msra.mxu0 0.0
        %1108 = vmatpush.msra.mxu0 0.0
        %1109 = vmatpush.msra.mxu0 %v496
        %1110 = vmatpush.msra.mxu0 %v493
        %1111 = vmatmul.f32.gmra.mxu0 %v1090
        %v1112 = vpop.f32.mrf.mxu0
        %v1113 = vadd.f32 0.0, %v1112
        %1114 = vmatmul.f32.gmra.mxu0 %v1093
        %v1115 = vpop.f32.mrf.mxu0
        %v1116 = vadd.f32 0.0, %v1115
        %1117 = vdwg.mxu0
        %v1118 = vld [vmem:[%s351] sm:$0xff]
        %v1119 = vld [vmem:[%s351 + $0x8] sm:$0xff]
        %vm1120 = vcmp.gt.f32.partialorder %v1118, 0.0
        %vm1121 = vcmp.gt.f32.partialorder %v1119, 0.0
        %v1122 = vld [vmem:[#allocation5 + $0x4] sm:$0x1]
        %v1123 = vld [vmem:[#allocation7 + $0x4] sm:$0x1]
        %1124 = vrot.lane.b32.xlu0 %v493, 96
        %v1125 = vpop.permute.xlu0 %1124
        %1126 = vrot.lane.b32.xlu0 %v496, 96
        %v1127 = vpop.permute.xlu0 %1126
        %v1129 = vsel %vm510, %v1122, 0
        %v1131 = vsel %vm510, %v1125, 0
        %v1133 = vsel %vm510, %v1127, 0
        %1135 = vmatpush.xpose.msra.mxu0 0.0
        %1136 = vmatpush.xpose.msra.mxu0 0.0
        %1137 = vmatpush.xpose.msra.mxu0 0.0
        %1138 = vmatpush.xpose.msra.mxu0 0.0
        %1139 = vmatpush.xpose.msra.mxu0 0.0
        %1140 = vmatpush.xpose.msra.mxu0 0.0
        %1141 = vmatpush.xpose.msra.mxu0 0.0
        %1142 = vmatpush.xpose.msra.mxu0 0.0
        %1143 = vmatpush.xpose.msra.mxu0 0.0
        %1144 = vmatpush.xpose.msra.mxu0 0.0
        %1145 = vmatpush.xpose.msra.mxu0 0.0
        %1146 = vmatpush.xpose.msra.mxu0 0.0
        %1147 = vmatpush.xpose.msra.mxu0 0.0
        %1148 = vmatpush.xpose.msra.mxu0 0.0
        %1149 = vmatpush.xpose.msra.mxu0 %v1133
        %1150 = vmatpush.xpose.msra.mxu0 %v1131
        %1151 = vmatmul.f32.gmra.mxu0 %v1129
        %v1152 = vpop.f32.mrf.mxu0
        %v1153 = vadd.f32 0.0, %v1152
        %1154 = vdwg.mxu0
        %v1155 = vperm.slane %v1123, 0
        %1157 = vrot.lane.b32.xlu0 %v1155, 32
        %v1158 = vpop.permute.xlu0 %1157
        %v1160 = vmul.f32 %v493, %v1158
        %v1161 = vmul.f32 %v496, %v1158
        %1164 = vrot.lane.b32.xlu0 %v1160, 96
        %v1165 = vpop.permute.xlu0 %1164
        %1166 = vrot.lane.b32.xlu0 %v1161, 96
        %v1167 = vpop.permute.xlu0 %1166
        %v1170 = vsel %vm510, %v1165, 0.0
        %1171 = vadd.xlane.f32.xlu0 %v1170
        %v1172 = vpop.xlane.xlu0 %1171
        %v1173 = vsel %vm510, %v1167, 0.0
        %1174 = vadd.xlane.f32.xlu0 %v1173
        %v1175 = vpop.xlane.xlu0 %1174
        %v1176 = vperm.slane %v1153, 0
        %v1177 = vmul.f32 %v1118, %v1176
        %v1178 = vmul.f32 %v1119, %v1176
        %v1179 = vadd.f32 %v1177, %v1172
        %v1180 = vadd.f32 %v1178, %v1175
        %vm1181 = vcmp.gt.f32.partialorder %v1179, 0.0
        %vm1182 = vcmp.gt.f32.partialorder %v1180, 0.0
        %v1183 = vmul.f32 %v1179, 0.2
        %v1184 = vmul.f32 %v1180, 0.2
        %v1185 = vsel %vm1181, %v1179, %v1183
        %v1186 = vsel %vm1182, %v1180, %v1184
        %v1187 = vsel %vm1120, %v1185, -1e+30
        %v1188 = vsel %vm1121, %v1186, -1e+30
        %v1189 = vsel %vm572, %v1187, -inf
        %1190 = vmax.xlane.f32.xlu0 %v1189
        %v1191 = vpop.xlane.xlu0 %1190
        %v1192 = vsel %vm572, %v1188, -inf
        %1193 = vmax.xlane.f32.xlu0 %v1192
        %v1194 = vpop.xlane.xlu0 %1193
        %vm1195 = vcmp.gt.f32.partialorder %v1191, -1e+29
        %vm1196 = vcmp.gt.f32.partialorder %v1194, -1e+29
        %v1197 = vsel %vm1195, %v1191, 0.0
        %v1198 = vsel %vm1196, %v1194, 0.0
        %v1199 = vsub.f32 %v1187, %v1197
        %v1200 = vsub.f32 %v1188, %v1198
        %v1201 = vmul.f32 %v1199, 1.442695
        %v1202 = vpow.pop %v1201
        %v1203 = vmul.f32 %v1200, 1.442695
        %v1204 = vpow.pop %v1203
        %v1205 = vsel %vm1120, %v1202, 0.0
        %v1206 = vsel %vm1121, %v1204, 0.0
        %v1207 = vsel %vm572, %v1205, 0.0
        %1208 = vadd.xlane.f32.xlu0 %v1207
        %v1209 = vpop.xlane.xlu0 %1208
        %v1210 = vsel %vm572, %v1206, 0.0
        %1211 = vadd.xlane.f32.xlu0 %v1210
        %v1212 = vpop.xlane.xlu0 %1211
        %v1213 = vmax.f32 %v1209, 1e-09
        %v1214 = vmax.f32 %v1212, 1e-09
        %v1215 = vrcp.pop %v1213
        %v1216 = vmul.f32 %v1213, %v1215
        %v1217 = vsub.f32 1.0, %v1216
        %v1218 = vmul.f32 %v1215, %v1217
        %v1219 = vadd.f32 %v1215, %v1218
        %vm1220 = vweird.f32 %v1213
        %vm1221 = vweird.f32 %v1215
        %vm1222 = vmor %vm1220, %vm1221
        %v1223 = vsel %vm1222, %v1215, %v1219
        %v1224 = vand.u32 2147483647, %v1213
        %vm1225 = vcmp.eq.f32.partialorder %v1224, 8.507059e+37
        %v1226 = vand.u32 %v1213, 2147483648
        %v1227 = vor.u32 1.1754944e-38, %v1226
        %v1228 = vsel %vm1225, %v1227, %v1223
        %v1229 = vmul.f32 %v1205, %v1228
        %v1230 = vrcp.pop %v1214
        %v1231 = vmul.f32 %v1214, %v1230
        %v1232 = vsub.f32 1.0, %v1231
        %v1233 = vmul.f32 %v1230, %v1232
        %v1234 = vadd.f32 %v1230, %v1233
        %vm1235 = vweird.f32 %v1214
        %vm1236 = vweird.f32 %v1230
        %vm1237 = vmor %vm1235, %vm1236
        %v1238 = vsel %vm1237, %v1230, %v1234
        %v1239 = vand.u32 2147483647, %v1214
        %vm1240 = vcmp.eq.f32.partialorder %v1239, 8.507059e+37
        %v1241 = vand.u32 %v1214, 2147483648
        %v1242 = vor.u32 1.1754944e-38, %v1241
        %v1243 = vsel %vm1240, %v1242, %v1238
        %v1244 = vmul.f32 %v1206, %v1243
        %v1245 = vmul.f32 %v1229, %v1118
        %v1246 = vmul.f32 %v1244, %v1119
        %v1250 = vsel %vm572, %v1245, 0
        %v1253 = vsel %vm572, %v1246, 0
        %1255 = vmatpush.msra.mxu0 0.0
        %1256 = vmatpush.msra.mxu0 0.0
        %1257 = vmatpush.msra.mxu0 0.0
        %1258 = vmatpush.msra.mxu0 0.0
        %1259 = vmatpush.msra.mxu0 0.0
        %1260 = vmatpush.msra.mxu0 0.0
        %1261 = vmatpush.msra.mxu0 0.0
        %1262 = vmatpush.msra.mxu0 0.0
        %1263 = vmatpush.msra.mxu0 0.0
        %1264 = vmatpush.msra.mxu0 0.0
        %1265 = vmatpush.msra.mxu0 0.0
        %1266 = vmatpush.msra.mxu0 0.0
        %1267 = vmatpush.msra.mxu0 0.0
        %1268 = vmatpush.msra.mxu0 0.0
        %1269 = vmatpush.msra.mxu0 %v1127
        %1270 = vmatpush.msra.mxu0 %v1125
        %1271 = vmatmul.f32.gmra.mxu0 %v1250
        %v1272 = vpop.f32.mrf.mxu0
        %v1273 = vadd.f32 0.0, %v1272
        %1274 = vmatmul.f32.gmra.mxu0 %v1253
        %v1275 = vpop.f32.mrf.mxu0
        %v1276 = vadd.f32 0.0, %v1275
        %1277 = vdwg.mxu0
        %v1278 = vld [vmem:[#allocation5 + $0x5] sm:$0x1]
        %v1279 = vld [vmem:[#allocation7 + $0x5] sm:$0x1]
        %1280 = vrot.lane.b32.xlu0 %v493, 64
        %v1281 = vpop.permute.xlu0 %1280
        %1282 = vrot.lane.b32.xlu0 %v496, 64
        %v1283 = vpop.permute.xlu0 %1282
        %v1285 = vsel %vm510, %v1278, 0
        %v1287 = vsel %vm510, %v1281, 0
        %v1289 = vsel %vm510, %v1283, 0
        %1291 = vmatpush.xpose.msra.mxu0 0.0
        %1292 = vmatpush.xpose.msra.mxu0 0.0
        %1293 = vmatpush.xpose.msra.mxu0 0.0
        %1294 = vmatpush.xpose.msra.mxu0 0.0
        %1295 = vmatpush.xpose.msra.mxu0 0.0
        %1296 = vmatpush.xpose.msra.mxu0 0.0
        %1297 = vmatpush.xpose.msra.mxu0 0.0
        %1298 = vmatpush.xpose.msra.mxu0 0.0
        %1299 = vmatpush.xpose.msra.mxu0 0.0
        %1300 = vmatpush.xpose.msra.mxu0 0.0
        %1301 = vmatpush.xpose.msra.mxu0 0.0
        %1302 = vmatpush.xpose.msra.mxu0 0.0
        %1303 = vmatpush.xpose.msra.mxu0 0.0
        %1304 = vmatpush.xpose.msra.mxu0 0.0
        %1305 = vmatpush.xpose.msra.mxu0 %v1289
        %1306 = vmatpush.xpose.msra.mxu0 %v1287
        %1307 = vmatmul.f32.gmra.mxu0 %v1285
        %v1308 = vpop.f32.mrf.mxu0
        %v1309 = vadd.f32 0.0, %v1308
        %1310 = vdwg.mxu0
        %v1311 = vperm.slane %v1279, 0
        %1313 = vrot.lane.b32.xlu0 %v1311, 64
        %v1314 = vpop.permute.xlu0 %1313
        %v1316 = vmul.f32 %v493, %v1314
        %v1317 = vmul.f32 %v496, %v1314
        %1320 = vrot.lane.b32.xlu0 %v1316, 64
        %v1321 = vpop.permute.xlu0 %1320
        %1322 = vrot.lane.b32.xlu0 %v1317, 64
        %v1323 = vpop.permute.xlu0 %1322
        %v1326 = vsel %vm510, %v1321, 0.0
        %1327 = vadd.xlane.f32.xlu0 %v1326
        %v1328 = vpop.xlane.xlu0 %1327
        %v1329 = vsel %vm510, %v1323, 0.0
        %1330 = vadd.xlane.f32.xlu0 %v1329
        %v1331 = vpop.xlane.xlu0 %1330
        %v1332 = vperm.slane %v1309, 0
        %v1333 = vmul.f32 %v1118, %v1332
        %v1334 = vmul.f32 %v1119, %v1332
        %v1335 = vadd.f32 %v1333, %v1328
        %v1336 = vadd.f32 %v1334, %v1331
        %vm1337 = vcmp.gt.f32.partialorder %v1335, 0.0
        %vm1338 = vcmp.gt.f32.partialorder %v1336, 0.0
        %v1339 = vmul.f32 %v1335, 0.2
        %v1340 = vmul.f32 %v1336, 0.2
        %v1341 = vsel %vm1337, %v1335, %v1339
        %v1342 = vsel %vm1338, %v1336, %v1340
        %v1343 = vsel %vm1120, %v1341, -1e+30
        %v1344 = vsel %vm1121, %v1342, -1e+30
        %v1345 = vsel %vm572, %v1343, -inf
        %1346 = vmax.xlane.f32.xlu0 %v1345
        %v1347 = vpop.xlane.xlu0 %1346
        %v1348 = vsel %vm572, %v1344, -inf
        %1349 = vmax.xlane.f32.xlu0 %v1348
        %v1350 = vpop.xlane.xlu0 %1349
        %vm1351 = vcmp.gt.f32.partialorder %v1347, -1e+29
        %vm1352 = vcmp.gt.f32.partialorder %v1350, -1e+29
        %v1353 = vsel %vm1351, %v1347, 0.0
        %v1354 = vsel %vm1352, %v1350, 0.0
        %v1355 = vsub.f32 %v1343, %v1353
        %v1356 = vsub.f32 %v1344, %v1354
        %v1357 = vmul.f32 %v1355, 1.442695
        %v1358 = vpow.pop %v1357
        %v1359 = vmul.f32 %v1356, 1.442695
        %v1360 = vpow.pop %v1359
        %v1361 = vsel %vm1120, %v1358, 0.0
        %v1362 = vsel %vm1121, %v1360, 0.0
        %v1363 = vsel %vm572, %v1361, 0.0
        %1364 = vadd.xlane.f32.xlu0 %v1363
        %v1365 = vpop.xlane.xlu0 %1364
        %v1366 = vsel %vm572, %v1362, 0.0
        %1367 = vadd.xlane.f32.xlu0 %v1366
        %v1368 = vpop.xlane.xlu0 %1367
        %v1369 = vmax.f32 %v1365, 1e-09
        %v1370 = vmax.f32 %v1368, 1e-09
        %v1371 = vrcp.pop %v1369
        %v1372 = vmul.f32 %v1369, %v1371
        %v1373 = vsub.f32 1.0, %v1372
        %v1374 = vmul.f32 %v1371, %v1373
        %v1375 = vadd.f32 %v1371, %v1374
        %vm1376 = vweird.f32 %v1369
        %vm1377 = vweird.f32 %v1371
        %vm1378 = vmor %vm1376, %vm1377
        %v1379 = vsel %vm1378, %v1371, %v1375
        %v1380 = vand.u32 2147483647, %v1369
        %vm1381 = vcmp.eq.f32.partialorder %v1380, 8.507059e+37
        %v1382 = vand.u32 %v1369, 2147483648
        %v1383 = vor.u32 1.1754944e-38, %v1382
        %v1384 = vsel %vm1381, %v1383, %v1379
        %v1385 = vmul.f32 %v1361, %v1384
        %v1386 = vrcp.pop %v1370
        %v1387 = vmul.f32 %v1370, %v1386
        %v1388 = vsub.f32 1.0, %v1387
        %v1389 = vmul.f32 %v1386, %v1388
        %v1390 = vadd.f32 %v1386, %v1389
        %vm1391 = vweird.f32 %v1370
        %vm1392 = vweird.f32 %v1386
        %vm1393 = vmor %vm1391, %vm1392
        %v1394 = vsel %vm1393, %v1386, %v1390
        %v1395 = vand.u32 2147483647, %v1370
        %vm1396 = vcmp.eq.f32.partialorder %v1395, 8.507059e+37
        %v1397 = vand.u32 %v1370, 2147483648
        %v1398 = vor.u32 1.1754944e-38, %v1397
        %v1399 = vsel %vm1396, %v1398, %v1394
        %v1400 = vmul.f32 %v1362, %v1399
        %v1401 = vmul.f32 %v1385, %v1118
        %v1402 = vmul.f32 %v1400, %v1119
        %v1406 = vsel %vm572, %v1401, 0
        %v1409 = vsel %vm572, %v1402, 0
        %1411 = vmatpush.msra.mxu0 0.0
        %1412 = vmatpush.msra.mxu0 0.0
        %1413 = vmatpush.msra.mxu0 0.0
        %1414 = vmatpush.msra.mxu0 0.0
        %1415 = vmatpush.msra.mxu0 0.0
        %1416 = vmatpush.msra.mxu0 0.0
        %1417 = vmatpush.msra.mxu0 0.0
        %1418 = vmatpush.msra.mxu0 0.0
        %1419 = vmatpush.msra.mxu0 0.0
        %1420 = vmatpush.msra.mxu0 0.0
        %1421 = vmatpush.msra.mxu0 0.0
        %1422 = vmatpush.msra.mxu0 0.0
        %1423 = vmatpush.msra.mxu0 0.0
        %1424 = vmatpush.msra.mxu0 0.0
        %1425 = vmatpush.msra.mxu0 %v1283
        %1426 = vmatpush.msra.mxu0 %v1281
        %1427 = vmatmul.f32.gmra.mxu0 %v1406
        %v1428 = vpop.f32.mrf.mxu0
        %v1429 = vadd.f32 0.0, %v1428
        %1430 = vmatmul.f32.gmra.mxu0 %v1409
        %v1431 = vpop.f32.mrf.mxu0
        %v1432 = vadd.f32 0.0, %v1431
        %1433 = vdwg.mxu0
        %1436 = vrot.lane.b32.xlu0 %v657, 32
        %v1437 = vpop.permute.xlu0 %1436
        %1438 = vrot.lane.b32.xlu0 %v660, 32
        %v1439 = vpop.permute.xlu0 %1438
        %1444 = vrot.lane.b32.xlu0 %v813, 64
        %v1445 = vpop.permute.xlu0 %1444
        %1446 = vrot.lane.b32.xlu0 %v816, 64
        %v1447 = vpop.permute.xlu0 %1446
        %1452 = vrot.lane.b32.xlu0 %v973, 96
        %v1453 = vpop.permute.xlu0 %1452
        %1454 = vrot.lane.b32.xlu0 %v976, 96
        %v1455 = vpop.permute.xlu0 %1454
        %1460 = vrot.lane.b32.xlu0 %v1273, 32
        %v1461 = vpop.permute.xlu0 %1460
        %1462 = vrot.lane.b32.xlu0 %v1276, 32
        %v1463 = vpop.permute.xlu0 %1462
        %1468 = vrot.lane.b32.xlu0 %v1429, 64
        %v1469 = vpop.permute.xlu0 %1468
        %1470 = vrot.lane.b32.xlu0 %v1432, 64
        %v1471 = vpop.permute.xlu0 %1470
        %v1474 = vsel %vm510, %v470, %v1437
        %v1475 = vsel %vm510, %v473, %v1439
        %vm1476 = vcmask 523264
        %v1477 = vsel %vm1476, %v1474, %v1445
        %v1478 = vsel %vm1476, %v1475, %v1447
        %vm1479 = vcmask 785408
        %v1480 = vsel %vm1479, %v1477, %v1453
        %v1481 = vsel %vm1479, %v1478, %v1455
        %v1482 = vsel %vm510, %v1113, %v1461
        %v1483 = vsel %vm510, %v1116, %v1463
        %v1484 = vsel %vm1476, %v1482, %v1469
        %v1485 = vsel %vm1476, %v1483, %v1471
        %1486 = vst [vmem:[%s414] sm:$0xff] %v1480
        %1487 = vst.msk [vmem:[%s414 + $0x8] sm:$0xff] %vm1479, %v1484
        %1488 = vst [vmem:[%s414 + $0x10] sm:$0xff] %v1481
        %1489 = vst.msk [vmem:[%s414 + $0x18] sm:$0xff] %vm1479, %v1485
        %s1490 = sand.u32 %s227, 1
        %s1491 = scalar_lea.sflag [#allocation4], %s1490
        %s1492 = sand.u32 %s227, 1
        %s1493 = smul.addr %s1492, 32
        %s1494 = scalar_lea.vmem [#allocation8], %s1493
        // Predicated region
        $region65: #{tpu_custom_call.1} parent=51 // pred_check
          %p1495 = pneg %p237
        $region66: #{tpu_custom_call.1} parent=51 // pred_check_branch
          %1497 = sbr.rel (%p1495) target = $region68
        $region67: #{tpu_custom_call.1} parent=51 // pred_region
          %1499 = vsyncadd %s1491, 0
          %s1500 = smul.addr %s26, 4
          %s1501 = smul.addr %s1500, 8
          %s1502 = scalar_lea.hbm %s8, %s1501
          %s1503 = sshll.u32 %s1494, 4
          %s1504 = int_to_ptr.vmem [resolvable:$true] %s1503
          %s1505 = sshll.u32 %s1502, 4
          %s1506 = int_to_ptr.hbm [resolvable:$true] %s1505
          %1511 = dma.vmem_to_hbm [thread:$0]  %s1504, 512, %s1506, %s1491, 256, 256, 16
        $region68: #{tpu_custom_call.1} parent=51 // pred_fallthru
          _
      $region52: #{tpu_custom_call.1} parent=5 // pred_fallthru
        _
      %p1512 = scmp.le.s32.totalorder 2, %s21
      // Predicated region
      $region69: #{tpu_custom_call.1} parent=5 // pred_check
        %p1513 = pneg %p1512
      $region70: #{tpu_custom_call.1} parent=5 // pred_check_branch
        %1515 = sbr.rel (%p1513) target = $region72
      $region71: #{tpu_custom_call.1} parent=5 // pred_region
        %s1516 = ssub.s32 %s21, 2
        // Predicated region
        $region73: #{tpu_custom_call.1} parent=71 // pred_check
          %p1517 = pneg %p243
        $region74: #{tpu_custom_call.1} parent=71 // pred_check_branch
          %1519 = sbr.rel (%p1517) target = $region76
        $region75: #{tpu_custom_call.1} parent=71 // pred_region
          %s1520 = sand.u32 %s228, 1
          %s1521 = scalar_lea.sflag [#allocation4], %s1520
          %s1522 = sand.u32 %s228, 1
          %s1523 = smul.addr %s1522, 32
          %s1524 = scalar_lea.vmem [#allocation8], %s1523
          %1526 = dma.done %s1521, 512
        $region76: #{tpu_custom_call.1} parent=71 // pred_fallthru
          _
      $region72: #{tpu_custom_call.1} parent=5 // pred_fallthru
        _
    $region6: #{tpu_custom_call.1} parent=1 // loop_footer
      %s25 = sadd.s32 1, %s21
    $region7: #{tpu_custom_call.1} parent=1 // loop_footer_branch
      %20 = sbr.rel target = $region3
    $region8: #{tpu_custom_call.1} parent=1 // loop_exit
      _
    %1527 = vsyncpa [#allocation3], 1
    %s1528 = scalar_lea.sflag [#allocation3], 1
    %1529 = vsyncpa %s1528, 1
    %1530 = vsyncpa [#allocation6], 1
    %1531 = vsyncpa [#allocation4], 1
    %s1532 = scalar_lea.sflag [#allocation4], 1
    %1533 = vsyncpa %s1532, 1

</llo_original>
